<compile_context>
chip_gen: v5e
topology: v5e:2x2
jax: 0.10.0
libtpu: 0.0.40
codegen_flags: <defaults>
</compile_context>

<pallas_src>
import functools
from dataclasses import dataclass

import jax
import jax.numpy as jnp
from jax.experimental import pallas as pl
from jax.experimental.pallas import tpu as pltpu


# ----------------------------- config ---------------------------------------
@dataclass
class Config:
    hidden_size: int = 32
    num_attention_heads: int = 4
    intermediate_size: int = 64
    num_module_layer: int = 2
    layer_norm_eps: float = 1e-12
    output_attentions: bool = False      # forced False by TransformerModuleNet
    output_hidden_states: bool = False


# ----------------------------- kernel helpers --------------------------------
def _layer_norm(x, g, b, eps):
    mu = jnp.mean(x, axis=-1, keepdims=True)
    xc = x - mu
    var = jnp.mean(xc * xc, axis=-1, keepdims=True)
    return xc * jax.lax.rsqrt(var + eps) * g + b


def _gelu(x):
    # TODO(synk): BERT's default activation is the exact erf-GELU; we use the
    # tanh approximation which lowers cleanly to the EUP.
    c = jnp.float32(0.7978845608028654)  # sqrt(2/pi)
    return 0.5 * x * (1.0 + jnp.tanh(c * (x + 0.044715 * x * x * x)))


# ----------------------------- fused module kernel ---------------------------
def _module_kernel(h_ref, a_ref,
                   wqkv_ref, bqkv_ref, wo_ref, bo_ref, g1_ref, b1_ref,
                   wi_ref, bi_ref, wo2_ref, bo2_ref, g2_ref, b2_ref,
                   out_ref, x_ref, *,
                   num_heads, head_dim, len_features, eps):
    """One grid step = one (batch, layer).  x_ref (VMEM scratch) carries the
    (S, H) activation slab across layer steps for the current batch."""
    S = x_ref.shape[0]
    H = num_heads * head_dim
    F = len_features
    layer = pl.program_id(1)
    num_layers = pl.num_programs(1)

    # First layer step for this batch: build concat([hidden_states, args]) in
    # VMEM.  TODO(synk): attention_mask is None in TransformerModuleNet; an
    # additive mask would be added to the scores before softmax.
    @pl.when(layer == 0)
    def _():
        x_ref[0:F, :] = h_ref[0].astype(jnp.float32)
        x_ref[F:S, :] = a_ref[0].astype(jnp.float32)

    x = x_ref[...]                                       # (S, H) f32

    # ---- fused QKV projection: one (S,H) x (H,3H) MXU push -----------------
    qkv = jnp.dot(x, wqkv_ref[0], preferred_element_type=jnp.float32) + bqkv_ref[0]

    # ---- multi-head self-attention; output projection folded per head ------
    scale = 1.0 / (head_dim ** 0.5)
    wo = wo_ref[0]                                       # (H, H)
    attn = jnp.zeros((S, H), jnp.float32)
    for hd in range(num_heads):
        lo, hi = hd * head_dim, (hd + 1) * head_dim
        q = qkv[:, lo:hi] * scale                        # (S, dH), pre-scaled
        k = qkv[:, H + lo:H + hi]                        # (S, dH)
        v = qkv[:, 2 * H + lo:2 * H + hi]                # (S, dH)
        s = jax.lax.dot_general(q, k, (((1,), (1,)), ((), ())),
                                preferred_element_type=jnp.float32)   # (S, S)
        s = s - jnp.max(s, axis=-1, keepdims=True)
        p = jnp.exp(s)
        p = p * pl.reciprocal(jnp.sum(p, axis=-1, keepdims=True), approx=True)
        ctx = jnp.dot(p, v, preferred_element_type=jnp.float32)       # (S, dH)
        # attn += ctx_h @ Wo[h*dH:(h+1)*dH, :]  (linearity of the projection)
        attn = attn + jnp.dot(ctx, wo[lo:hi, :],
                              preferred_element_type=jnp.float32)     # (S, H)
    attn = attn + bo_ref[0]

    # ---- residual + LayerNorm 1 ---------------------------------------------
    h1 = _layer_norm(attn + x, g1_ref[0], b1_ref[0], eps)

    # ---- feed-forward (GELU) -> output proj -> residual + LayerNorm 2 -------
    inter = _gelu(jnp.dot(h1, wi_ref[0],
                          preferred_element_type=jnp.float32) + bi_ref[0])
    ffn = jnp.dot(inter, wo2_ref[0],
                  preferred_element_type=jnp.float32) + bo2_ref[0]
    h2 = _layer_norm(ffn + h1, g2_ref[0], b2_ref[0], eps)

    x_ref[...] = h2                                      # carry to next layer

    # Last layer: emit only the first len_features tokens.
    @pl.when(layer == num_layers - 1)
    def _():
        out_ref[0] = h2[0:F, :].astype(out_ref.dtype)


# ----------------------------- wrapper ---------------------------------------
def transformer_module(hidden_states, args, params, cfg: Config,
                       attention_mask=None):
    """hidden_states: (B, F, H), args: (B, A, H). Returns (out,) with
    out = stacked-BertLayer(concat(hidden_states, args))[:, :F]."""
    # TODO(synk): output_attentions / output_hidden_states are not materialized
    # by the fused kernel (TransformerModuleNet forces output_attentions=False).
    B, F, H = hidden_states.shape
    A = args.shape[1]
    S = F + A
    L = cfg.num_module_layer
    nH = cfg.num_attention_heads
    dH = H // nH
    I = cfg.intermediate_size

    kern = functools.partial(_module_kernel, num_heads=nH, head_dim=dH,
                             len_features=F, eps=cfg.layer_norm_eps)

    def per_batch(shape):
        return pl.BlockSpec((1,) + shape, lambda b, l: (b, 0, 0))

    def per_layer(shape):
        return pl.BlockSpec((1,) + shape, lambda b, l: (l, 0, 0))

    out = pl.pallas_call(
        kern,
        out_shape=jax.ShapeDtypeStruct((B, F, H), hidden_states.dtype),
        grid=(B, L),
        in_specs=[
            per_batch((F, H)),               # hidden_states
            per_batch((A, H)),               # args (already embedded)
            per_layer((H, 3 * H)),           # wqkv
            per_layer((1, 3 * H)),           # bqkv
            per_layer((H, H)),               # wo   (attention output proj)
            per_layer((1, H)),               # bo
            per_layer((1, H)),               # ln1 gamma
            per_layer((1, H)),               # ln1 beta
            per_layer((H, I)),               # wi   (intermediate)
            per_layer((1, I)),               # bi
            per_layer((I, H)),               # wo2  (ffn output)
            per_layer((1, H)),               # bo2
            per_layer((1, H)),               # ln2 gamma
            per_layer((1, H)),               # ln2 beta
        ],
        out_specs=per_batch((F, H)),
        scratch_shapes=[pltpu.VMEM((S, H), jnp.float32)],
        compiler_params=pltpu.CompilerParams(
            dimension_semantics=("parallel", "arbitrary"),
            vmem_limit_bytes=4 * 1024 * 1024),
    )(hidden_states, args,
      params["wqkv"], params["bqkv"], params["wo"], params["bo"],
      params["ln1_g"], params["ln1_b"],
      params["wi"], params["bi"], params["wo2"], params["bo2"],
      params["ln2_g"], params["ln2_b"])
    return (out,)


# ----------------------------- params ----------------------------------------
def init_params(key, cfg: Config):
    """Stacked per-layer weights, [L, ...].  Note: weights are stored (in, out);
    loading a PyTorch nn.Linear checkpoint ((out, in)) requires a transpose."""
    H, I, L = cfg.hidden_size, cfg.intermediate_size, cfg.num_module_layer

    def one(k):
        ks = jax.random.split(k, 6)
        w = lambda kk, s: 0.02 * jax.random.normal(kk, s, jnp.float32)
        wq, wk, wv = w(ks[0], (H, H)), w(ks[1], (H, H)), w(ks[2], (H, H))
        return dict(
            wqkv=jnp.concatenate([wq, wk, wv], axis=1),            # (H, 3H)
            bqkv=jnp.zeros((1, 3 * H), jnp.float32),
            wo=w(ks[3], (H, H)), bo=jnp.zeros((1, H), jnp.float32),
            ln1_g=jnp.ones((1, H), jnp.float32),
            ln1_b=jnp.zeros((1, H), jnp.float32),
            wi=w(ks[4], (H, I)), bi=jnp.zeros((1, I), jnp.float32),
            wo2=w(ks[5], (I, H)), bo2=jnp.zeros((1, H), jnp.float32),
            ln2_g=jnp.ones((1, H), jnp.float32),
            ln2_b=jnp.zeros((1, H), jnp.float32),
        )

    layers = [one(k) for k in jax.random.split(key, L)]
    return {name: jnp.stack([lp[name] for lp in layers], axis=0)
            for name in layers[0]}


# ----------------------------- main -------------------------------------------
if __name__ == "__main__":
    cfg = Config()
    key = jax.random.PRNGKey(0)
    k_h, k_a, k_p = jax.random.split(key, 3)

    B, len_features, len_args, H = 2, 8, 4, cfg.hidden_size
    hidden_states = jax.random.normal(k_h, (B, len_features, H), jnp.float32)
    args = jax.random.normal(k_a, (B, len_args, H), jnp.float32)
    params = init_params(k_p, cfg)

    outputs = transformer_module(hidden_states, args, params, cfg)
    out = jax.block_until_ready(outputs[0])
    assert out.shape == (B, len_features, H), out.shape
    assert bool(jnp.all(jnp.isfinite(out)))
    print("KERNEL_OK")
</pallas_src>

<mosaic_0001>
module attributes {stable_mosaic.version = 11 : i64} {
  func.func @_module_kernel(%arg0: i32, %arg1: i32, %arg2: memref<1x8x32xf32, #tpu.memory_space<vmem>>, %arg3: memref<1x4x32xf32, #tpu.memory_space<vmem>>, %arg4: memref<1x32x96xf32, #tpu.memory_space<vmem>>, %arg5: memref<1x1x96xf32, #tpu.memory_space<vmem>>, %arg6: memref<1x32x32xf32, #tpu.memory_space<vmem>>, %arg7: memref<1x1x32xf32, #tpu.memory_space<vmem>>, %arg8: memref<1x1x32xf32, #tpu.memory_space<vmem>>, %arg9: memref<1x1x32xf32, #tpu.memory_space<vmem>>, %arg10: memref<1x32x64xf32, #tpu.memory_space<vmem>>, %arg11: memref<1x1x64xf32, #tpu.memory_space<vmem>>, %arg12: memref<1x64x32xf32, #tpu.memory_space<vmem>>, %arg13: memref<1x1x32xf32, #tpu.memory_space<vmem>>, %arg14: memref<1x1x32xf32, #tpu.memory_space<vmem>>, %arg15: memref<1x1x32xf32, #tpu.memory_space<vmem>>, %arg16: memref<1x8x32xf32, #tpu.memory_space<vmem>>, %arg17: memref<12x32xf32, #tpu.memory_space<vmem>>) attributes {dimension_semantics = [#tpu.dimension_semantics<parallel>, #tpu.dimension_semantics<arbitrary>], iteration_bounds = array<i64: 2, 2>, scalar_prefetch = 0 : i64, scratch_operands = 1 : i64, tpu.core_type = #tpu.core_type<tc>, window_params = [{transform_indices = @transform_0, window_bounds = array<i64: 1, 8, 32>}, {transform_indices = @transform_1, window_bounds = array<i64: 1, 4, 32>}, {transform_indices = @transform_2, window_bounds = array<i64: 1, 32, 96>}, {transform_indices = @transform_3, window_bounds = array<i64: 1, 1, 96>}, {transform_indices = @transform_4, window_bounds = array<i64: 1, 32, 32>}, {transform_indices = @transform_5, window_bounds = array<i64: 1, 1, 32>}, {transform_indices = @transform_6, window_bounds = array<i64: 1, 1, 32>}, {transform_indices = @transform_7, window_bounds = array<i64: 1, 1, 32>}, {transform_indices = @transform_8, window_bounds = array<i64: 1, 32, 64>}, {transform_indices = @transform_9, window_bounds = array<i64: 1, 1, 64>}, {transform_indices = @transform_10, window_bounds = array<i64: 1, 64, 32>}, {transform_indices = @transform_11, window_bounds = array<i64: 1, 1, 32>}, {transform_indices = @transform_12, window_bounds = array<i64: 1, 1, 32>}, {transform_indices = @transform_13, window_bounds = array<i64: 1, 1, 32>}, {transform_indices = @transform_14, window_bounds = array<i64: 1, 8, 32>}]} {
    %c0_i32 = arith.constant 0 : i32
    %0 = arith.cmpi eq, %arg1, %c0_i32 : i32
    %1 = arith.extui %0 : i1 to i32
    %c0_i32_0 = arith.constant 0 : i32
    %2 = arith.cmpi ne, %1, %c0_i32_0 : i32
    scf.if %2 {
      %c0_82 = arith.constant 0 : index
      %c0_83 = arith.constant 0 : index
      %c0_84 = arith.constant 0 : index
      %179 = vector.load %arg2[%c0_82, %c0_83, %c0_84] : memref<1x8x32xf32, #tpu.memory_space<vmem>>, vector<1x8x32xf32>
      %180 = vector.shape_cast %179 : vector<1x8x32xf32> to vector<8x32xf32>
      %c0_85 = arith.constant 0 : index
      %c0_86 = arith.constant 0 : index
      %181 = vector.load %arg17[%c0_85, %c0_86] : memref<12x32xf32, #tpu.memory_space<vmem>>, vector<8x32xf32>
      tpu.vector_store %arg17[%c0_85, %c0_86], %180 {strides = array<i32>} : memref<12x32xf32, #tpu.memory_space<vmem>>, vector<8x32xf32>,
      %c0_87 = arith.constant 0 : index
      %c0_88 = arith.constant 0 : index
      %c0_89 = arith.constant 0 : index
      %182 = vector.load %arg3[%c0_87, %c0_88, %c0_89] : memref<1x4x32xf32, #tpu.memory_space<vmem>>, vector<1x4x32xf32>
      %183 = vector.shape_cast %182 : vector<1x4x32xf32> to vector<4x32xf32>
      %c8 = arith.constant 8 : index
      %c0_90 = arith.constant 0 : index
      %184 = vector.load %arg17[%c8, %c0_90] : memref<12x32xf32, #tpu.memory_space<vmem>>, vector<4x32xf32>
      tpu.vector_store %arg17[%c8, %c0_90], %183 {strides = array<i32>} : memref<12x32xf32, #tpu.memory_space<vmem>>, vector<4x32xf32>,
    } else {
    }
    %c0 = arith.constant 0 : index
    %c0_1 = arith.constant 0 : index
    %3 = vector.load %arg17[%c0, %c0_1] : memref<12x32xf32, #tpu.memory_space<vmem>>, vector<12x32xf32>
    %c0_2 = arith.constant 0 : index
    %c0_3 = arith.constant 0 : index
    %c0_4 = arith.constant 0 : index
    %4 = vector.load %arg4[%c0_2, %c0_3, %c0_4] : memref<1x32x96xf32, #tpu.memory_space<vmem>>, vector<1x32x96xf32>
    %5 = vector.shape_cast %4 : vector<1x32x96xf32> to vector<32x96xf32>
    %cst = arith.constant dense<0.000000e+00> : vector<12x96xf32>
    %6 = tpu.matmul %3, %5, %cst {dimension_numbers = #tpu.dot_dimension_numbers<[1], [0], [0], [1], [0, 0, 1, 1], [], []>} : vector<12x32xf32>, vector<32x96xf32>, vector<12x96xf32> -> vector<12x96xf32>
    %c0_5 = arith.constant 0 : index
    %c0_6 = arith.constant 0 : index
    %c0_7 = arith.constant 0 : index
    %7 = vector.load %arg5[%c0_5, %c0_6, %c0_7] : memref<1x1x96xf32, #tpu.memory_space<vmem>>, vector<1x1x96xf32>
    %8 = vector.shape_cast %7 : vector<1x1x96xf32> to vector<1x96xf32>
    %9 = vector.broadcast %8 : vector<1x96xf32> to vector<12x96xf32>
    %10 = arith.addf %6, %9 : vector<12x96xf32>
    %c0_8 = arith.constant 0 : index
    %c0_9 = arith.constant 0 : index
    %c0_10 = arith.constant 0 : index
    %11 = vector.load %arg6[%c0_8, %c0_9, %c0_10] : memref<1x32x32xf32, #tpu.memory_space<vmem>>, vector<1x32x32xf32>
    %12 = vector.shape_cast %11 : vector<1x32x32xf32> to vector<32x32xf32>
    %cst_11 = arith.constant 0.000000e+00 : f32
    %13 = vector.broadcast %cst_11 : f32 to vector<12x32xf32>
    %14 = vector.extract_strided_slice %10 {offsets = [0, 0], sizes = [12, 8], strides = [1, 1]} : vector<12x96xf32> to vector<12x8xf32>
    %cst_12 = arith.constant 0.353553385 : f32
    %15 = vector.broadcast %cst_12 : f32 to vector<12x8xf32>
    %16 = arith.mulf %14, %15 : vector<12x8xf32>
    %17 = vector.extract_strided_slice %10 {offsets = [0, 32], sizes = [12, 8], strides = [1, 1]} : vector<12x96xf32> to vector<12x8xf32>
    %18 = vector.extract_strided_slice %10 {offsets = [0, 64], sizes = [12, 8], strides = [1, 1]} : vector<12x96xf32> to vector<12x8xf32>
    %cst_13 = arith.constant dense<0.000000e+00> : vector<12x12xf32>
    %19 = tpu.matmul %16, %17, %cst_13 {dimension_numbers = #tpu.dot_dimension_numbers<[1], [1], [0], [0], [0, 0, 1, 0], [], []>} : vector<12x8xf32>, vector<12x8xf32>, vector<12x12xf32> -> vector<12x12xf32>
    %cst_14 = arith.constant dense<0xFF800000> : vector<12xf32>
    %20 = vector.multi_reduction <maximumf>, %19, %cst_14 [1] : vector<12x12xf32> to vector<12xf32>
    %21 = vector.shape_cast %20 : vector<12xf32> to vector<12x1xf32>
    %22 = vector.broadcast %21 : vector<12x1xf32> to vector<12x12xf32>
    %23 = arith.subf %19, %22 : vector<12x12xf32>
    %24 = math.exp %23 : vector<12x12xf32>
    %cst_15 = arith.constant dense<0.000000e+00> : vector<12xf32>
    %25 = vector.multi_reduction <add>, %24, %cst_15 [1] : vector<12x12xf32> to vector<12xf32>
    %26 = vector.shape_cast %25 : vector<12xf32> to vector<12x1xf32>
    %27 = tpu.reciprocal %26 {approx = true} : vector<12x1xf32> -> vector<12x1xf32>
    %28 = vector.broadcast %27 : vector<12x1xf32> to vector<12x12xf32>
    %29 = arith.mulf %24, %28 : vector<12x12xf32>
    %cst_16 = arith.constant dense<0.000000e+00> : vector<12x8xf32>
    %30 = tpu.matmul %29, %18, %cst_16 {dimension_numbers = #tpu.dot_dimension_numbers<[1], [0], [0], [1], [0, 0, 1, 1], [], []>} : vector<12x12xf32>, vector<12x8xf32>, vector<12x8xf32> -> vector<12x8xf32>
    %31 = vector.extract_strided_slice %12 {offsets = [0, 0], sizes = [8, 32], strides = [1, 1]} : vector<32x32xf32> to vector<8x32xf32>
    %cst_17 = arith.constant dense<0.000000e+00> : vector<12x32xf32>
    %32 = tpu.matmul %30, %31, %cst_17 {dimension_numbers = #tpu.dot_dimension_numbers<[1], [0], [0], [1], [0, 0, 1, 1], [], []>} : vector<12x8xf32>, vector<8x32xf32>, vector<12x32xf32> -> vector<12x32xf32>
    %33 = arith.addf %13, %32 : vector<12x32xf32>
    %34 = vector.extract_strided_slice %10 {offsets = [0, 8], sizes = [12, 8], strides = [1, 1]} : vector<12x96xf32> to vector<12x8xf32>
    %cst_18 = arith.constant 0.353553385 : f32
    %35 = vector.broadcast %cst_18 : f32 to vector<12x8xf32>
    %36 = arith.mulf %34, %35 : vector<12x8xf32>
    %37 = vector.extract_strided_slice %10 {offsets = [0, 40], sizes = [12, 8], strides = [1, 1]} : vector<12x96xf32> to vector<12x8xf32>
    %38 = vector.extract_strided_slice %10 {offsets = [0, 72], sizes = [12, 8], strides = [1, 1]} : vector<12x96xf32> to vector<12x8xf32>
    %cst_19 = arith.constant dense<0.000000e+00> : vector<12x12xf32>
    %39 = tpu.matmul %36, %37, %cst_19 {dimension_numbers = #tpu.dot_dimension_numbers<[1], [1], [0], [0], [0, 0, 1, 0], [], []>} : vector<12x8xf32>, vector<12x8xf32>, vector<12x12xf32> -> vector<12x12xf32>
    %cst_20 = arith.constant dense<0xFF800000> : vector<12xf32>
    %40 = vector.multi_reduction <maximumf>, %39, %cst_20 [1] : vector<12x12xf32> to vector<12xf32>
    %41 = vector.shape_cast %40 : vector<12xf32> to vector<12x1xf32>
    %42 = vector.broadcast %41 : vector<12x1xf32> to vector<12x12xf32>
    %43 = arith.subf %39, %42 : vector<12x12xf32>
    %44 = math.exp %43 : vector<12x12xf32>
    %cst_21 = arith.constant dense<0.000000e+00> : vector<12xf32>
    %45 = vector.multi_reduction <add>, %44, %cst_21 [1] : vector<12x12xf32> to vector<12xf32>
    %46 = vector.shape_cast %45 : vector<12xf32> to vector<12x1xf32>
    %47 = tpu.reciprocal %46 {approx = true} : vector<12x1xf32> -> vector<12x1xf32>
    %48 = vector.broadcast %47 : vector<12x1xf32> to vector<12x12xf32>
    %49 = arith.mulf %44, %48 : vector<12x12xf32>
    %cst_22 = arith.constant dense<0.000000e+00> : vector<12x8xf32>
    %50 = tpu.matmul %49, %38, %cst_22 {dimension_numbers = #tpu.dot_dimension_numbers<[1], [0], [0], [1], [0, 0, 1, 1], [], []>} : vector<12x12xf32>, vector<12x8xf32>, vector<12x8xf32> -> vector<12x8xf32>
    %51 = vector.extract_strided_slice %12 {offsets = [8, 0], sizes = [8, 32], strides = [1, 1]} : vector<32x32xf32> to vector<8x32xf32>
    %cst_23 = arith.constant dense<0.000000e+00> : vector<12x32xf32>
    %52 = tpu.matmul %50, %51, %cst_23 {dimension_numbers = #tpu.dot_dimension_numbers<[1], [0], [0], [1], [0, 0, 1, 1], [], []>} : vector<12x8xf32>, vector<8x32xf32>, vector<12x32xf32> -> vector<12x32xf32>
    %53 = arith.addf %33, %52 : vector<12x32xf32>
    %54 = vector.extract_strided_slice %10 {offsets = [0, 16], sizes = [12, 8], strides = [1, 1]} : vector<12x96xf32> to vector<12x8xf32>
    %cst_24 = arith.constant 0.353553385 : f32
    %55 = vector.broadcast %cst_24 : f32 to vector<12x8xf32>
    %56 = arith.mulf %54, %55 : vector<12x8xf32>
    %57 = vector.extract_strided_slice %10 {offsets = [0, 48], sizes = [12, 8], strides = [1, 1]} : vector<12x96xf32> to vector<12x8xf32>
    %58 = vector.extract_strided_slice %10 {offsets = [0, 80], sizes = [12, 8], strides = [1, 1]} : vector<12x96xf32> to vector<12x8xf32>
    %cst_25 = arith.constant dense<0.000000e+00> : vector<12x12xf32>
    %59 = tpu.matmul %56, %57, %cst_25 {dimension_numbers = #tpu.dot_dimension_numbers<[1], [1], [0], [0], [0, 0, 1, 0], [], []>} : vector<12x8xf32>, vector<12x8xf32>, vector<12x12xf32> -> vector<12x12xf32>
    %cst_26 = arith.constant dense<0xFF800000> : vector<12xf32>
    %60 = vector.multi_reduction <maximumf>, %59, %cst_26 [1] : vector<12x12xf32> to vector<12xf32>
    %61 = vector.shape_cast %60 : vector<12xf32> to vector<12x1xf32>
    %62 = vector.broadcast %61 : vector<12x1xf32> to vector<12x12xf32>
    %63 = arith.subf %59, %62 : vector<12x12xf32>
    %64 = math.exp %63 : vector<12x12xf32>
    %cst_27 = arith.constant dense<0.000000e+00> : vector<12xf32>
    %65 = vector.multi_reduction <add>, %64, %cst_27 [1] : vector<12x12xf32> to vector<12xf32>
    %66 = vector.shape_cast %65 : vector<12xf32> to vector<12x1xf32>
    %67 = tpu.reciprocal %66 {approx = true} : vector<12x1xf32> -> vector<12x1xf32>
    %68 = vector.broadcast %67 : vector<12x1xf32> to vector<12x12xf32>
    %69 = arith.mulf %64, %68 : vector<12x12xf32>
    %cst_28 = arith.constant dense<0.000000e+00> : vector<12x8xf32>
    %70 = tpu.matmul %69, %58, %cst_28 {dimension_numbers = #tpu.dot_dimension_numbers<[1], [0], [0], [1], [0, 0, 1, 1], [], []>} : vector<12x12xf32>, vector<12x8xf32>, vector<12x8xf32> -> vector<12x8xf32>
    %71 = vector.extract_strided_slice %12 {offsets = [16, 0], sizes = [8, 32], strides = [1, 1]} : vector<32x32xf32> to vector<8x32xf32>
    %cst_29 = arith.constant dense<0.000000e+00> : vector<12x32xf32>
    %72 = tpu.matmul %70, %71, %cst_29 {dimension_numbers = #tpu.dot_dimension_numbers<[1], [0], [0], [1], [0, 0, 1, 1], [], []>} : vector<12x8xf32>, vector<8x32xf32>, vector<12x32xf32> -> vector<12x32xf32>
    %73 = arith.addf %53, %72 : vector<12x32xf32>
    %74 = vector.extract_strided_slice %10 {offsets = [0, 24], sizes = [12, 8], strides = [1, 1]} : vector<12x96xf32> to vector<12x8xf32>
    %cst_30 = arith.constant 0.353553385 : f32
    %75 = vector.broadcast %cst_30 : f32 to vector<12x8xf32>
    %76 = arith.mulf %74, %75 : vector<12x8xf32>
    %77 = vector.extract_strided_slice %10 {offsets = [0, 56], sizes = [12, 8], strides = [1, 1]} : vector<12x96xf32> to vector<12x8xf32>
    %78 = vector.extract_strided_slice %10 {offsets = [0, 88], sizes = [12, 8], strides = [1, 1]} : vector<12x96xf32> to vector<12x8xf32>
    %cst_31 = arith.constant dense<0.000000e+00> : vector<12x12xf32>
    %79 = tpu.matmul %76, %77, %cst_31 {dimension_numbers = #tpu.dot_dimension_numbers<[1], [1], [0], [0], [0, 0, 1, 0], [], []>} : vector<12x8xf32>, vector<12x8xf32>, vector<12x12xf32> -> vector<12x12xf32>
    %cst_32 = arith.constant dense<0xFF800000> : vector<12xf32>
    %80 = vector.multi_reduction <maximumf>, %79, %cst_32 [1] : vector<12x12xf32> to vector<12xf32>
    %81 = vector.shape_cast %80 : vector<12xf32> to vector<12x1xf32>
    %82 = vector.broadcast %81 : vector<12x1xf32> to vector<12x12xf32>
    %83 = arith.subf %79, %82 : vector<12x12xf32>
    %84 = math.exp %83 : vector<12x12xf32>
    %cst_33 = arith.constant dense<0.000000e+00> : vector<12xf32>
    %85 = vector.multi_reduction <add>, %84, %cst_33 [1] : vector<12x12xf32> to vector<12xf32>
    %86 = vector.shape_cast %85 : vector<12xf32> to vector<12x1xf32>
    %87 = tpu.reciprocal %86 {approx = true} : vector<12x1xf32> -> vector<12x1xf32>
    %88 = vector.broadcast %87 : vector<12x1xf32> to vector<12x12xf32>
    %89 = arith.mulf %84, %88 : vector<12x12xf32>
    %cst_34 = arith.constant dense<0.000000e+00> : vector<12x8xf32>
    %90 = tpu.matmul %89, %78, %cst_34 {dimension_numbers = #tpu.dot_dimension_numbers<[1], [0], [0], [1], [0, 0, 1, 1], [], []>} : vector<12x12xf32>, vector<12x8xf32>, vector<12x8xf32> -> vector<12x8xf32>
    %91 = vector.extract_strided_slice %12 {offsets = [24, 0], sizes = [8, 32], strides = [1, 1]} : vector<32x32xf32> to vector<8x32xf32>
    %cst_35 = arith.constant dense<0.000000e+00> : vector<12x32xf32>
    %92 = tpu.matmul %90, %91, %cst_35 {dimension_numbers = #tpu.dot_dimension_numbers<[1], [0], [0], [1], [0, 0, 1, 1], [], []>} : vector<12x8xf32>, vector<8x32xf32>, vector<12x32xf32> -> vector<12x32xf32>
    %93 = arith.addf %73, %92 : vector<12x32xf32>
    %c0_36 = arith.constant 0 : index
    %c0_37 = arith.constant 0 : index
    %c0_38 = arith.constant 0 : index
    %94 = vector.load %arg7[%c0_36, %c0_37, %c0_38] : memref<1x1x32xf32, #tpu.memory_space<vmem>>, vector<1x1x32xf32>
    %95 = vector.shape_cast %94 : vector<1x1x32xf32> to vector<1x32xf32>
    %96 = vector.broadcast %95 : vector<1x32xf32> to vector<12x32xf32>
    %97 = arith.addf %93, %96 : vector<12x32xf32>
    %98 = arith.addf %97, %3 : vector<12x32xf32>
    %c0_39 = arith.constant 0 : index
    %c0_40 = arith.constant 0 : index
    %c0_41 = arith.constant 0 : index
    %99 = vector.load %arg8[%c0_39, %c0_40, %c0_41] : memref<1x1x32xf32, #tpu.memory_space<vmem>>, vector<1x1x32xf32>
    %100 = vector.shape_cast %99 : vector<1x1x32xf32> to vector<1x32xf32>
    %c0_42 = arith.constant 0 : index
    %c0_43 = arith.constant 0 : index
    %c0_44 = arith.constant 0 : index
    %101 = vector.load %arg9[%c0_42, %c0_43, %c0_44] : memref<1x1x32xf32, #tpu.memory_space<vmem>>, vector<1x1x32xf32>
    %102 = vector.shape_cast %101 : vector<1x1x32xf32> to vector<1x32xf32>
    %cst_45 = arith.constant dense<0.000000e+00> : vector<12xf32>
    %103 = vector.multi_reduction <add>, %98, %cst_45 [1] : vector<12x32xf32> to vector<12xf32>
    %104 = vector.shape_cast %103 : vector<12xf32> to vector<12x1xf32>
    %cst_46 = arith.constant 3.200000e+01 : f32
    %105 = vector.broadcast %cst_46 : f32 to vector<12x1xf32>
    %106 = arith.divf %104, %105 : vector<12x1xf32>
    %107 = vector.broadcast %106 : vector<12x1xf32> to vector<12x32xf32>
    %108 = arith.subf %98, %107 : vector<12x32xf32>
    %109 = arith.mulf %108, %108 : vector<12x32xf32>
    %cst_47 = arith.constant dense<0.000000e+00> : vector<12xf32>
    %110 = vector.multi_reduction <add>, %109, %cst_47 [1] : vector<12x32xf32> to vector<12xf32>
    %111 = vector.shape_cast %110 : vector<12xf32> to vector<12x1xf32>
    %cst_48 = arith.constant 3.200000e+01 : f32
    %112 = vector.broadcast %cst_48 : f32 to vector<12x1xf32>
    %113 = arith.divf %111, %112 : vector<12x1xf32>
    %cst_49 = arith.constant 9.99999996E-13 : f32
    %114 = vector.broadcast %cst_49 : f32 to vector<12x1xf32>
    %115 = arith.addf %113, %114 : vector<12x1xf32>
    %116 = math.rsqrt %115 : vector<12x1xf32>
    %117 = vector.broadcast %116 : vector<12x1xf32> to vector<12x32xf32>
    %118 = arith.mulf %108, %117 : vector<12x32xf32>
    %119 = vector.broadcast %100 : vector<1x32xf32> to vector<12x32xf32>
    %120 = arith.mulf %118, %119 : vector<12x32xf32>
    %121 = vector.broadcast %102 : vector<1x32xf32> to vector<12x32xf32>
    %122 = arith.addf %120, %121 : vector<12x32xf32>
    %c0_50 = arith.constant 0 : index
    %c0_51 = arith.constant 0 : index
    %c0_52 = arith.constant 0 : index
    %123 = vector.load %arg10[%c0_50, %c0_51, %c0_52] : memref<1x32x64xf32, #tpu.memory_space<vmem>>, vector<1x32x64xf32>
    %124 = vector.shape_cast %123 : vector<1x32x64xf32> to vector<32x64xf32>
    %cst_53 = arith.constant dense<0.000000e+00> : vector<12x64xf32>
    %125 = tpu.matmul %122, %124, %cst_53 {dimension_numbers = #tpu.dot_dimension_numbers<[1], [0], [0], [1], [0, 0, 1, 1], [], []>} : vector<12x32xf32>, vector<32x64xf32>, vector<12x64xf32> -> vector<12x64xf32>
    %c0_54 = arith.constant 0 : index
    %c0_55 = arith.constant 0 : index
    %c0_56 = arith.constant 0 : index
    %126 = vector.load %arg11[%c0_54, %c0_55, %c0_56] : memref<1x1x64xf32, #tpu.memory_space<vmem>>, vector<1x1x64xf32>
    %127 = vector.shape_cast %126 : vector<1x1x64xf32> to vector<1x64xf32>
    %128 = vector.broadcast %127 : vector<1x64xf32> to vector<12x64xf32>
    %129 = arith.addf %125, %128 : vector<12x64xf32>
    %cst_57 = arith.constant 5.000000e-01 : f32
    %130 = vector.broadcast %cst_57 : f32 to vector<12x64xf32>
    %131 = arith.mulf %130, %129 : vector<12x64xf32>
    %cst_58 = arith.constant 4.471500e-02 : f32
    %132 = vector.broadcast %cst_58 : f32 to vector<12x64xf32>
    %133 = arith.mulf %132, %129 : vector<12x64xf32>
    %134 = arith.mulf %133, %129 : vector<12x64xf32>
    %135 = arith.mulf %134, %129 : vector<12x64xf32>
    %136 = arith.addf %129, %135 : vector<12x64xf32>
    %cst_59 = arith.constant 0.797884583 : f32
    %137 = vector.broadcast %cst_59 : f32 to vector<12x64xf32>
    %138 = arith.mulf %137, %136 : vector<12x64xf32>
    %139 = math.tanh %138 : vector<12x64xf32>
    %cst_60 = arith.constant 1.000000e+00 : f32
    %140 = vector.broadcast %cst_60 : f32 to vector<12x64xf32>
    %141 = arith.addf %140, %139 : vector<12x64xf32>
    %142 = arith.mulf %131, %141 : vector<12x64xf32>
    %c0_61 = arith.constant 0 : index
    %c0_62 = arith.constant 0 : index
    %c0_63 = arith.constant 0 : index
    %143 = vector.load %arg12[%c0_61, %c0_62, %c0_63] : memref<1x64x32xf32, #tpu.memory_space<vmem>>, vector<1x64x32xf32>
    %144 = vector.shape_cast %143 : vector<1x64x32xf32> to vector<64x32xf32>
    %cst_64 = arith.constant dense<0.000000e+00> : vector<12x32xf32>
    %145 = tpu.matmul %142, %144, %cst_64 {dimension_numbers = #tpu.dot_dimension_numbers<[1], [0], [0], [1], [0, 0, 1, 1], [], []>} : vector<12x64xf32>, vector<64x32xf32>, vector<12x32xf32> -> vector<12x32xf32>
    %c0_65 = arith.constant 0 : index
    %c0_66 = arith.constant 0 : index
    %c0_67 = arith.constant 0 : index
    %146 = vector.load %arg13[%c0_65, %c0_66, %c0_67] : memref<1x1x32xf32, #tpu.memory_space<vmem>>, vector<1x1x32xf32>
    %147 = vector.shape_cast %146 : vector<1x1x32xf32> to vector<1x32xf32>
    %148 = vector.broadcast %147 : vector<1x32xf32> to vector<12x32xf32>
    %149 = arith.addf %145, %148 : vector<12x32xf32>
    %150 = arith.addf %149, %122 : vector<12x32xf32>
    %c0_68 = arith.constant 0 : index
    %c0_69 = arith.constant 0 : index
    %c0_70 = arith.constant 0 : index
    %151 = vector.load %arg14[%c0_68, %c0_69, %c0_70] : memref<1x1x32xf32, #tpu.memory_space<vmem>>, vector<1x1x32xf32>
    %152 = vector.shape_cast %151 : vector<1x1x32xf32> to vector<1x32xf32>
    %c0_71 = arith.constant 0 : index
    %c0_72 = arith.constant 0 : index
    %c0_73 = arith.constant 0 : index
    %153 = vector.load %arg15[%c0_71, %c0_72, %c0_73] : memref<1x1x32xf32, #tpu.memory_space<vmem>>, vector<1x1x32xf32>
    %154 = vector.shape_cast %153 : vector<1x1x32xf32> to vector<1x32xf32>
    %cst_74 = arith.constant dense<0.000000e+00> : vector<12xf32>
    %155 = vector.multi_reduction <add>, %150, %cst_74 [1] : vector<12x32xf32> to vector<12xf32>
    %156 = vector.shape_cast %155 : vector<12xf32> to vector<12x1xf32>
    %cst_75 = arith.constant 3.200000e+01 : f32
    %157 = vector.broadcast %cst_75 : f32 to vector<12x1xf32>
    %158 = arith.divf %156, %157 : vector<12x1xf32>
    %159 = vector.broadcast %158 : vector<12x1xf32> to vector<12x32xf32>
    %160 = arith.subf %150, %159 : vector<12x32xf32>
    %161 = arith.mulf %160, %160 : vector<12x32xf32>
    %cst_76 = arith.constant dense<0.000000e+00> : vector<12xf32>
    %162 = vector.multi_reduction <add>, %161, %cst_76 [1] : vector<12x32xf32> to vector<12xf32>
    %163 = vector.shape_cast %162 : vector<12xf32> to vector<12x1xf32>
    %cst_77 = arith.constant 3.200000e+01 : f32
    %164 = vector.broadcast %cst_77 : f32 to vector<12x1xf32>
    %165 = arith.divf %163, %164 : vector<12x1xf32>
    %cst_78 = arith.constant 9.99999996E-13 : f32
    %166 = vector.broadcast %cst_78 : f32 to vector<12x1xf32>
    %167 = arith.addf %165, %166 : vector<12x1xf32>
    %168 = math.rsqrt %167 : vector<12x1xf32>
    %169 = vector.broadcast %168 : vector<12x1xf32> to vector<12x32xf32>
    %170 = arith.mulf %160, %169 : vector<12x32xf32>
    %171 = vector.broadcast %152 : vector<1x32xf32> to vector<12x32xf32>
    %172 = arith.mulf %170, %171 : vector<12x32xf32>
    %173 = vector.broadcast %154 : vector<1x32xf32> to vector<12x32xf32>
    %174 = arith.addf %172, %173 : vector<12x32xf32>
    %c0_79 = arith.constant 0 : index
    %c0_80 = arith.constant 0 : index
    %175 = vector.load %arg17[%c0_79, %c0_80] : memref<12x32xf32, #tpu.memory_space<vmem>>, vector<12x32xf32>
    tpu.vector_store %arg17[%c0_79, %c0_80], %174 {strides = array<i32>} : memref<12x32xf32, #tpu.memory_space<vmem>>, vector<12x32xf32>,
    %c1_i32 = arith.constant 1 : i32
    %176 = arith.cmpi eq, %arg1, %c1_i32 : i32
    %177 = arith.extui %176 : i1 to i32
    %c0_i32_81 = arith.constant 0 : i32
    %178 = arith.cmpi ne, %177, %c0_i32_81 : i32
    scf.if %178 {
      %179 = vector.extract_strided_slice %174 {offsets = [0, 0], sizes = [8, 32], strides = [1, 1]} : vector<12x32xf32> to vector<8x32xf32>
      %c0_82 = arith.constant 0 : index
      %c0_83 = arith.constant 0 : index
      %c0_84 = arith.constant 0 : index
      %180 = vector.load %arg16[%c0_82, %c0_83, %c0_84] : memref<1x8x32xf32, #tpu.memory_space<vmem>>, vector<1x8x32xf32>
      %181 = vector.shape_cast %180 : vector<1x8x32xf32> to vector<8x32xf32>
      %182 = vector.shape_cast %179 : vector<8x32xf32> to vector<1x8x32xf32>
      tpu.vector_store %arg16[%c0_82, %c0_83, %c0_84], %182 {strides = array<i32>} : memref<1x8x32xf32, #tpu.memory_space<vmem>>, vector<1x8x32xf32>,
    } else {
    }
    return
  }
  func.func @transform_0(%arg0: i32, %arg1: i32) -> (i32, i32, i32) {
    %c0_i32 = arith.constant 0 : i32
    %c0_i32_0 = arith.constant 0 : i32
    %c0_i32_1 = arith.constant 0 : i32
    return %arg0, %c0_i32, %c0_i32_0 : i32, i32, i32
  }
  func.func @transform_1(%arg0: i32, %arg1: i32) -> (i32, i32, i32) {
    %c0_i32 = arith.constant 0 : i32
    %c0_i32_0 = arith.constant 0 : i32
    %c0_i32_1 = arith.constant 0 : i32
    return %arg0, %c0_i32, %c0_i32_0 : i32, i32, i32
  }
  func.func @transform_2(%arg0: i32, %arg1: i32) -> (i32, i32, i32) {
    %c0_i32 = arith.constant 0 : i32
    %c0_i32_0 = arith.constant 0 : i32
    %c0_i32_1 = arith.constant 0 : i32
    return %arg1, %c0_i32, %c0_i32_0 : i32, i32, i32
  }
  func.func @transform_3(%arg0: i32, %arg1: i32) -> (i32, i32, i32) {
    %c0_i32 = arith.constant 0 : i32
    %c0_i32_0 = arith.constant 0 : i32
    %c0_i32_1 = arith.constant 0 : i32
    return %arg1, %c0_i32, %c0_i32_0 : i32, i32, i32
  }
  func.func @transform_4(%arg0: i32, %arg1: i32) -> (i32, i32, i32) {
    %c0_i32 = arith.constant 0 : i32
    %c0_i32_0 = arith.constant 0 : i32
    %c0_i32_1 = arith.constant 0 : i32
    return %arg1, %c0_i32, %c0_i32_0 : i32, i32, i32
  }
  func.func @transform_5(%arg0: i32, %arg1: i32) -> (i32, i32, i32) {
    %c0_i32 = arith.constant 0 : i32
    %c0_i32_0 = arith.constant 0 : i32
    %c0_i32_1 = arith.constant 0 : i32
    return %arg1, %c0_i32, %c0_i32_0 : i32, i32, i32
  }
  func.func @transform_6(%arg0: i32, %arg1: i32) -> (i32, i32, i32) {
    %c0_i32 = arith.constant 0 : i32
    %c0_i32_0 = arith.constant 0 : i32
    %c0_i32_1 = arith.constant 0 : i32
    return %arg1, %c0_i32, %c0_i32_0 : i32, i32, i32
  }
  func.func @transform_7(%arg0: i32, %arg1: i32) -> (i32, i32, i32) {
    %c0_i32 = arith.constant 0 : i32
    %c0_i32_0 = arith.constant 0 : i32
    %c0_i32_1 = arith.constant 0 : i32
    return %arg1, %c0_i32, %c0_i32_0 : i32, i32, i32
  }
  func.func @transform_8(%arg0: i32, %arg1: i32) -> (i32, i32, i32) {
    %c0_i32 = arith.constant 0 : i32
    %c0_i32_0 = arith.constant 0 : i32
    %c0_i32_1 = arith.constant 0 : i32
    return %arg1, %c0_i32, %c0_i32_0 : i32, i32, i32
  }
  func.func @transform_9(%arg0: i32, %arg1: i32) -> (i32, i32, i32) {
    %c0_i32 = arith.constant 0 : i32
    %c0_i32_0 = arith.constant 0 : i32
    %c0_i32_1 = arith.constant 0 : i32
    return %arg1, %c0_i32, %c0_i32_0 : i32, i32, i32
  }
  func.func @transform_10(%arg0: i32, %arg1: i32) -> (i32, i32, i32) {
    %c0_i32 = arith.constant 0 : i32
    %c0_i32_0 = arith.constant 0 : i32
    %c0_i32_1 = arith.constant 0 : i32
    return %arg1, %c0_i32, %c0_i32_0 : i32, i32, i32
  }
  func.func @transform_11(%arg0: i32, %arg1: i32) -> (i32, i32, i32) {
    %c0_i32 = arith.constant 0 : i32
    %c0_i32_0 = arith.constant 0 : i32
    %c0_i32_1 = arith.constant 0 : i32
    return %arg1, %c0_i32, %c0_i32_0 : i32, i32, i32
  }
  func.func @transform_12(%arg0: i32, %arg1: i32) -> (i32, i32, i32) {
    %c0_i32 = arith.constant 0 : i32
    %c0_i32_0 = arith.constant 0 : i32
    %c0_i32_1 = arith.constant 0 : i32
    return %arg1, %c0_i32, %c0_i32_0 : i32, i32, i32
  }
  func.func @transform_13(%arg0: i32, %arg1: i32) -> (i32, i32, i32) {
    %c0_i32 = arith.constant 0 : i32
    %c0_i32_0 = arith.constant 0 : i32
    %c0_i32_1 = arith.constant 0 : i32
    return %arg1, %c0_i32, %c0_i32_0 : i32, i32, i32
  }
  func.func @transform_14(%arg0: i32, %arg1: i32) -> (i32, i32, i32) {
    %c0_i32 = arith.constant 0 : i32
    %c0_i32_0 = arith.constant 0 : i32
    %c0_i32_1 = arith.constant 0 : i32
    return %arg0, %c0_i32, %c0_i32_0 : i32, i32, i32
  }
}

</mosaic_0001>

<llo_original>
// kernel: tpu_custom_call.1
$region0: #{tpu_custom_call.1}
  #allocation0 [shape = 'u32[]', space=smem, size = 0x4, offset = 0x4, fixed_abs, tag = 'smem constant byte address 0x4 - core index']
  #allocation1 [shape = 'u32[72,128]{1,0:T(1,128)}', space=vmem, size = 0x9000, scoped, tag = 'internal scratch']
  #allocation2 [shape = 'f32[12,32]{1,0:T(8,128)}', space=vmem, size = 0x2000, scoped, tag = 'scratch operand']
  %s0 = inlined_call_operand.hbm [shape: f32[2,8,32], index: 0, kind: input, shape index: {}]
  %s1 = inlined_call_operand.hbm [shape: f32[2,4,32], index: 1, kind: input, shape index: {}]
  %s2 = inlined_call_operand.vmem [shape: f32[2,32,96], index: 2, kind: input, shape index: {}]
  %s3 = inlined_call_operand.vmem [shape: f32[2,1,96], index: 3, kind: input, shape index: {}]
  %s4 = inlined_call_operand.vmem [shape: f32[2,32,32], index: 4, kind: input, shape index: {}]
  %s5 = inlined_call_operand.hbm [shape: f32[2,1,32], index: 5, kind: input, shape index: {}]
  %s6 = inlined_call_operand.vmem [shape: f32[2,1,32], index: 6, kind: input, shape index: {}]
  %s7 = inlined_call_operand.hbm [shape: f32[2,1,32], index: 7, kind: input, shape index: {}]
  %s8 = inlined_call_operand.vmem [shape: f32[2,32,64], index: 8, kind: input, shape index: {}]
  %s9 = inlined_call_operand.vmem [shape: f32[2,1,64], index: 9, kind: input, shape index: {}]
  %s10 = inlined_call_operand.vmem [shape: f32[2,64,32], index: 10, kind: input, shape index: {}]
  %s11 = inlined_call_operand.vmem [shape: f32[2,1,32], index: 11, kind: input, shape index: {}]
  %s12 = inlined_call_operand.vmem [shape: f32[2,1,32], index: 12, kind: input, shape index: {}]
  %s13 = inlined_call_operand.hbm [shape: f32[2,1,32], index: 13, kind: input, shape index: {}]
  %s14 = inlined_call_operand.hbm [shape: f32[2,8,32], index: 14, kind: output, shape index: {}]
  %s15 = sld [smem:[#allocation0]]
  $region117: #{tpu_custom_call.1} parent=0
    _
  %s17 = ssub.s32 1, %s15
  %s18 = scalar_select 0, %s17, %s15
  $region1: #{tpu_custom_call.1} parent=0
    #allocation3 [shape = 'u8[8192]{0}', space=vmem, size = 0x2000, scoped, tag = 'input window, operand 0']
    #allocation4 [shape = 's32[2]{0}', space=sflag, size = 0x8, scoped, tag = 'scoped memory for tpu_custom_call.1']
    #allocation5 [shape = 's32[2]{0}', space=sflag, size = 0x8, scoped, tag = 'scoped memory for tpu_custom_call.1']
    #allocation6 [shape = 'u8[4096]{0}', space=vmem, size = 0x1000, scoped, tag = 'input window, operand 1']
    #allocation7 [shape = 's32[2]{0}', space=sflag, size = 0x8, scoped, tag = 'scoped memory for tpu_custom_call.1']
    #allocation8 [shape = 'u8[1024]{0}', space=vmem, size = 0x400, scoped, tag = 'input window, operand 5']
    #allocation9 [shape = 'u8[1024]{0}', space=vmem, size = 0x400, scoped, tag = 'input window, operand 7']
    #allocation10 [shape = 's32[2]{0}', space=sflag, size = 0x8, scoped, tag = 'scoped memory for tpu_custom_call.1']
    #allocation11 [shape = 'u8[1024]{0}', space=vmem, size = 0x400, scoped, tag = 'input window, operand 13']
    #allocation12 [shape = 'u8[8192]{0}', space=vmem, size = 0x2000, scoped, tag = 'output window, operand 0']
    %19 = vsyncpa [#allocation4], 0
    %s20 = scalar_lea.sflag [#allocation4], 1
    %21 = vsyncpa %s20, 0
    %22 = vsyncpa [#allocation7], 0
    %s23 = scalar_lea.sflag [#allocation7], 1
    %24 = vsyncpa %s23, 0
    %25 = vsyncpa [#allocation10], 0
    %s26 = scalar_lea.sflag [#allocation10], 1
    %27 = vsyncpa %s26, 0
    %28 = vsyncpa [#allocation5], 0
    %s29 = scalar_lea.sflag [#allocation5], 1
    %30 = vsyncpa %s29, 0
    loop: start=0, step=1, limit=6
    $region2: #{tpu_custom_call.1} parent=1 // loop_pre_header
      _
    $region3: #{tpu_custom_call.1} parent=1 // loop_header
      %s32 = sphi 0, %s36
      %p33 = scmp.ge.s32.totalorder %s32, 6
      %s39 = sphi 0, %s51
      %s40 = sphi 0, %s47
      %s41 = sphi 0, %s39
      %s42 = sphi 0, %s40
      %s43 = sphi 0, %s41
      %s44 = sphi 0, %s42
      %s54 = sphi 0, %s56
      %s57 = sphi 0, %s54
      %s58 = sphi 0, %s57
      %s74 = sphi 0, %s58
      %s80 = sphi 0, %s82
      %s83 = sphi 0, %s80
      %s84 = sphi 0, %s83
      %s100 = sphi 0, %s84
      %s106 = sphi 0, %s108
      %s109 = sphi 0, %s106
      %s110 = sphi 0, %s109
      %s126 = sphi 0, %s110
      %s132 = sphi 0, %s134
      %s135 = sphi 0, %s132
      %s136 = sphi 0, %s135
      %s152 = sphi 0, %s136
      %s158 = sphi 0, %s160
      %s161 = sphi 0, %s158
      %s162 = sphi 0, %s161
      %s178 = sphi 0, %s162
      %s184 = sphi 0, %s186
      %s187 = sphi 0, %s184
      %s188 = sphi 0, %s187
      %s204 = sphi 0, %s188
      %s210 = sphi 0, %s212
      %s213 = sphi 0, %s210
      %s214 = sphi 0, %s213
      %s230 = sphi 0, %s214
      %s236 = sphi 0, %s238
      %s239 = sphi 0, %s236
      %s240 = sphi 0, %s239
      %s256 = sphi 0, %s240
      %s262 = sphi 0, %s264
      %s265 = sphi 0, %s262
      %s266 = sphi 0, %s265
      %s282 = sphi 0, %s266
      %s288 = sphi 0, %s290
      %s291 = sphi 0, %s288
      %s292 = sphi 0, %s291
      %s308 = sphi 0, %s292
      %s314 = sphi 0, %s316
      %s317 = sphi 0, %s314
      %s318 = sphi 0, %s317
      %s334 = sphi 0, %s318
      %s340 = sphi 0, %s342
      %s343 = sphi 0, %s340
      %s344 = sphi 0, %s343
      %s360 = sphi 0, %s344
      %s366 = sphi 0, %s368
      %s369 = sphi 0, %s366
      %s370 = sphi 0, %s369
      %s386 = sphi 0, %s370
      %s392 = sphi 0, %s394
      %s395 = sphi 0, %s392
      %s396 = sphi 0, %s395
      %s412 = sphi 0, %s396
      %s418 = sphi 0, %s420
      %s421 = sphi 0, %s418
      %s422 = sphi 0, %s421
      %s438 = sphi 0, %s422
    $region4: #{tpu_custom_call.1} parent=1 // loop_header_branch
      %35 = sbr.rel (%p33) target = $region8
    $region5: #{tpu_custom_call.1} parent=1 // loop_body
      %s37 = ssub.s32 %s32, 1
      %s38 = ssub.s32 %s32, 2
      %s45 = sadd.s32 1, %s40
      %p46 = scmp.ge.s32.totalorder %s45, 2
      %s47 = scalar_select %p46, 0, %s45
      %s48 = sadd.s32 1, %s39
      %s49 = scalar_select %p46, %s48, %s39
      %p50 = scmp.ge.s32.totalorder %s49, 2
      %s51 = scalar_select %p50, 0, %s49
      %s52 = ssub.s32 %s39, %s51
      %p53 = scmp.eq.s32.totalorder %s52, 0
      %s55 = sadd.s32 %s54, 1
      %s56 = scalar_select %p53, %s54, %s55
      %p59 = pneg %p53
      %p60 = scmp.eq.s32.totalorder %s32, 3
      %p61 = por %p59, %p60
      %p62 = scmp.ne.s32.totalorder %s54, %s57
      %p63 = scmp.eq.s32.totalorder %s32, 0
      %p64 = por %p62, %p63
      %p65 = scmp.ne.s32.totalorder %s54, %s57
      %p66 = scmp.eq.s32.totalorder %s37, 3
      %p67 = por %p65, %p66
      %p68 = scmp.ne.s32.totalorder %s57, %s58
      %p69 = scmp.eq.s32.totalorder %s37, 0
      %p70 = por %p68, %p69
      %p71 = scmp.ne.s32.totalorder %s57, %s58
      %p72 = scmp.eq.s32.totalorder %s38, 3
      %p73 = por %p71, %p72
      %p75 = scmp.ne.s32.totalorder %s58, %s74
      %p76 = scmp.eq.s32.totalorder %s38, 0
      %p77 = por %p75, %p76
      %s78 = ssub.s32 %s39, %s51
      %p79 = scmp.eq.s32.totalorder %s78, 0
      %s81 = sadd.s32 %s80, 1
      %s82 = scalar_select %p79, %s80, %s81
      %p85 = pneg %p79
      %p86 = scmp.eq.s32.totalorder %s32, 3
      %p87 = por %p85, %p86
      %p88 = scmp.ne.s32.totalorder %s80, %s83
      %p89 = scmp.eq.s32.totalorder %s32, 0
      %p90 = por %p88, %p89
      %p91 = scmp.ne.s32.totalorder %s80, %s83
      %p92 = scmp.eq.s32.totalorder %s37, 3
      %p93 = por %p91, %p92
      %p94 = scmp.ne.s32.totalorder %s83, %s84
      %p95 = scmp.eq.s32.totalorder %s37, 0
      %p96 = por %p94, %p95
      %p97 = scmp.ne.s32.totalorder %s83, %s84
      %p98 = scmp.eq.s32.totalorder %s38, 3
      %p99 = por %p97, %p98
      %p101 = scmp.ne.s32.totalorder %s84, %s100
      %p102 = scmp.eq.s32.totalorder %s38, 0
      %p103 = por %p101, %p102
      %s104 = ssub.s32 %s40, %s47
      %p105 = scmp.eq.s32.totalorder %s104, 0
      %s107 = sadd.s32 %s106, 1
      %s108 = scalar_select %p105, %s106, %s107
      %p111 = pneg %p105
      %p112 = scmp.eq.s32.totalorder %s32, 3
      %p113 = por %p111, %p112
      %p114 = scmp.ne.s32.totalorder %s106, %s109
      %p115 = scmp.eq.s32.totalorder %s32, 0
      %p116 = por %p114, %p115
      %p117 = scmp.ne.s32.totalorder %s106, %s109
      %p118 = scmp.eq.s32.totalorder %s37, 3
      %p119 = por %p117, %p118
      %p120 = scmp.ne.s32.totalorder %s109, %s110
      %p121 = scmp.eq.s32.totalorder %s37, 0
      %p122 = por %p120, %p121
      %p123 = scmp.ne.s32.totalorder %s109, %s110
      %p124 = scmp.eq.s32.totalorder %s38, 3
      %p125 = por %p123, %p124
      %p127 = scmp.ne.s32.totalorder %s110, %s126
      %p128 = scmp.eq.s32.totalorder %s38, 0
      %p129 = por %p127, %p128
      %s130 = ssub.s32 %s40, %s47
      %p131 = scmp.eq.s32.totalorder %s130, 0
      %s133 = sadd.s32 %s132, 1
      %s134 = scalar_select %p131, %s132, %s133
      %p137 = pneg %p131
      %p138 = scmp.eq.s32.totalorder %s32, 3
      %p139 = por %p137, %p138
      %p140 = scmp.ne.s32.totalorder %s132, %s135
      %p141 = scmp.eq.s32.totalorder %s32, 0
      %p142 = por %p140, %p141
      %p143 = scmp.ne.s32.totalorder %s132, %s135
      %p144 = scmp.eq.s32.totalorder %s37, 3
      %p145 = por %p143, %p144
      %p146 = scmp.ne.s32.totalorder %s135, %s136
      %p147 = scmp.eq.s32.totalorder %s37, 0
      %p148 = por %p146, %p147
      %p149 = scmp.ne.s32.totalorder %s135, %s136
      %p150 = scmp.eq.s32.totalorder %s38, 3
      %p151 = por %p149, %p150
      %p153 = scmp.ne.s32.totalorder %s136, %s152
      %p154 = scmp.eq.s32.totalorder %s38, 0
      %p155 = por %p153, %p154
      %s156 = ssub.s32 %s40, %s47
      %p157 = scmp.eq.s32.totalorder %s156, 0
      %s159 = sadd.s32 %s158, 1
      %s160 = scalar_select %p157, %s158, %s159
      %p163 = pneg %p157
      %p164 = scmp.eq.s32.totalorder %s32, 3
      %p165 = por %p163, %p164
      %p166 = scmp.ne.s32.totalorder %s158, %s161
      %p167 = scmp.eq.s32.totalorder %s32, 0
      %p168 = por %p166, %p167
      %p169 = scmp.ne.s32.totalorder %s158, %s161
      %p170 = scmp.eq.s32.totalorder %s37, 3
      %p171 = por %p169, %p170
      %p172 = scmp.ne.s32.totalorder %s161, %s162
      %p173 = scmp.eq.s32.totalorder %s37, 0
      %p174 = por %p172, %p173
      %p175 = scmp.ne.s32.totalorder %s161, %s162
      %p176 = scmp.eq.s32.totalorder %s38, 3
      %p177 = por %p175, %p176
      %p179 = scmp.ne.s32.totalorder %s162, %s178
      %p180 = scmp.eq.s32.totalorder %s38, 0
      %p181 = por %p179, %p180
      %s182 = ssub.s32 %s40, %s47
      %p183 = scmp.eq.s32.totalorder %s182, 0
      %s185 = sadd.s32 %s184, 1
      %s186 = scalar_select %p183, %s184, %s185
      %p189 = pneg %p183
      %p190 = scmp.eq.s32.totalorder %s32, 3
      %p191 = por %p189, %p190
      %p192 = scmp.ne.s32.totalorder %s184, %s187
      %p193 = scmp.eq.s32.totalorder %s32, 0
      %p194 = por %p192, %p193
      %p195 = scmp.ne.s32.totalorder %s184, %s187
      %p196 = scmp.eq.s32.totalorder %s37, 3
      %p197 = por %p195, %p196
      %p198 = scmp.ne.s32.totalorder %s187, %s188
      %p199 = scmp.eq.s32.totalorder %s37, 0
      %p200 = por %p198, %p199
      %p201 = scmp.ne.s32.totalorder %s187, %s188
      %p202 = scmp.eq.s32.totalorder %s38, 3
      %p203 = por %p201, %p202
      %p205 = scmp.ne.s32.totalorder %s188, %s204
      %p206 = scmp.eq.s32.totalorder %s38, 0
      %p207 = por %p205, %p206
      %s208 = ssub.s32 %s40, %s47
      %p209 = scmp.eq.s32.totalorder %s208, 0
      %s211 = sadd.s32 %s210, 1
      %s212 = scalar_select %p209, %s210, %s211
      %p215 = pneg %p209
      %p216 = scmp.eq.s32.totalorder %s32, 3
      %p217 = por %p215, %p216
      %p218 = scmp.ne.s32.totalorder %s210, %s213
      %p219 = scmp.eq.s32.totalorder %s32, 0
      %p220 = por %p218, %p219
      %p221 = scmp.ne.s32.totalorder %s210, %s213
      %p222 = scmp.eq.s32.totalorder %s37, 3
      %p223 = por %p221, %p222
      %p224 = scmp.ne.s32.totalorder %s213, %s214
      %p225 = scmp.eq.s32.totalorder %s37, 0
      %p226 = por %p224, %p225
      %p227 = scmp.ne.s32.totalorder %s213, %s214
      %p228 = scmp.eq.s32.totalorder %s38, 3
      %p229 = por %p227, %p228
      %p231 = scmp.ne.s32.totalorder %s214, %s230
      %p232 = scmp.eq.s32.totalorder %s38, 0
      %p233 = por %p231, %p232
      %s234 = ssub.s32 %s40, %s47
      %p235 = scmp.eq.s32.totalorder %s234, 0
      %s237 = sadd.s32 %s236, 1
      %s238 = scalar_select %p235, %s236, %s237
      %p241 = pneg %p235
      %p242 = scmp.eq.s32.totalorder %s32, 3
      %p243 = por %p241, %p242
      %p244 = scmp.ne.s32.totalorder %s236, %s239
      %p245 = scmp.eq.s32.totalorder %s32, 0
      %p246 = por %p244, %p245
      %p247 = scmp.ne.s32.totalorder %s236, %s239
      %p248 = scmp.eq.s32.totalorder %s37, 3
      %p249 = por %p247, %p248
      %p250 = scmp.ne.s32.totalorder %s239, %s240
      %p251 = scmp.eq.s32.totalorder %s37, 0
      %p252 = por %p250, %p251
      %p253 = scmp.ne.s32.totalorder %s239, %s240
      %p254 = scmp.eq.s32.totalorder %s38, 3
      %p255 = por %p253, %p254
      %p257 = scmp.ne.s32.totalorder %s240, %s256
      %p258 = scmp.eq.s32.totalorder %s38, 0
      %p259 = por %p257, %p258
      %s260 = ssub.s32 %s40, %s47
      %p261 = scmp.eq.s32.totalorder %s260, 0
      %s263 = sadd.s32 %s262, 1
      %s264 = scalar_select %p261, %s262, %s263
      %p267 = pneg %p261
      %p268 = scmp.eq.s32.totalorder %s32, 3
      %p269 = por %p267, %p268
      %p270 = scmp.ne.s32.totalorder %s262, %s265
      %p271 = scmp.eq.s32.totalorder %s32, 0
      %p272 = por %p270, %p271
      %p273 = scmp.ne.s32.totalorder %s262, %s265
      %p274 = scmp.eq.s32.totalorder %s37, 3
      %p275 = por %p273, %p274
      %p276 = scmp.ne.s32.totalorder %s265, %s266
      %p277 = scmp.eq.s32.totalorder %s37, 0
      %p278 = por %p276, %p277
      %p279 = scmp.ne.s32.totalorder %s265, %s266
      %p280 = scmp.eq.s32.totalorder %s38, 3
      %p281 = por %p279, %p280
      %p283 = scmp.ne.s32.totalorder %s266, %s282
      %p284 = scmp.eq.s32.totalorder %s38, 0
      %p285 = por %p283, %p284
      %s286 = ssub.s32 %s40, %s47
      %p287 = scmp.eq.s32.totalorder %s286, 0
      %s289 = sadd.s32 %s288, 1
      %s290 = scalar_select %p287, %s288, %s289
      %p293 = pneg %p287
      %p294 = scmp.eq.s32.totalorder %s32, 3
      %p295 = por %p293, %p294
      %p296 = scmp.ne.s32.totalorder %s288, %s291
      %p297 = scmp.eq.s32.totalorder %s32, 0
      %p298 = por %p296, %p297
      %p299 = scmp.ne.s32.totalorder %s288, %s291
      %p300 = scmp.eq.s32.totalorder %s37, 3
      %p301 = por %p299, %p300
      %p302 = scmp.ne.s32.totalorder %s291, %s292
      %p303 = scmp.eq.s32.totalorder %s37, 0
      %p304 = por %p302, %p303
      %p305 = scmp.ne.s32.totalorder %s291, %s292
      %p306 = scmp.eq.s32.totalorder %s38, 3
      %p307 = por %p305, %p306
      %p309 = scmp.ne.s32.totalorder %s292, %s308
      %p310 = scmp.eq.s32.totalorder %s38, 0
      %p311 = por %p309, %p310
      %s312 = ssub.s32 %s40, %s47
      %p313 = scmp.eq.s32.totalorder %s312, 0
      %s315 = sadd.s32 %s314, 1
      %s316 = scalar_select %p313, %s314, %s315
      %p319 = pneg %p313
      %p320 = scmp.eq.s32.totalorder %s32, 3
      %p321 = por %p319, %p320
      %p322 = scmp.ne.s32.totalorder %s314, %s317
      %p323 = scmp.eq.s32.totalorder %s32, 0
      %p324 = por %p322, %p323
      %p325 = scmp.ne.s32.totalorder %s314, %s317
      %p326 = scmp.eq.s32.totalorder %s37, 3
      %p327 = por %p325, %p326
      %p328 = scmp.ne.s32.totalorder %s317, %s318
      %p329 = scmp.eq.s32.totalorder %s37, 0
      %p330 = por %p328, %p329
      %p331 = scmp.ne.s32.totalorder %s317, %s318
      %p332 = scmp.eq.s32.totalorder %s38, 3
      %p333 = por %p331, %p332
      %p335 = scmp.ne.s32.totalorder %s318, %s334
      %p336 = scmp.eq.s32.totalorder %s38, 0
      %p337 = por %p335, %p336
      %s338 = ssub.s32 %s40, %s47
      %p339 = scmp.eq.s32.totalorder %s338, 0
      %s341 = sadd.s32 %s340, 1
      %s342 = scalar_select %p339, %s340, %s341
      %p345 = pneg %p339
      %p346 = scmp.eq.s32.totalorder %s32, 3
      %p347 = por %p345, %p346
      %p348 = scmp.ne.s32.totalorder %s340, %s343
      %p349 = scmp.eq.s32.totalorder %s32, 0
      %p350 = por %p348, %p349
      %p351 = scmp.ne.s32.totalorder %s340, %s343
      %p352 = scmp.eq.s32.totalorder %s37, 3
      %p353 = por %p351, %p352
      %p354 = scmp.ne.s32.totalorder %s343, %s344
      %p355 = scmp.eq.s32.totalorder %s37, 0
      %p356 = por %p354, %p355
      %p357 = scmp.ne.s32.totalorder %s343, %s344
      %p358 = scmp.eq.s32.totalorder %s38, 3
      %p359 = por %p357, %p358
      %p361 = scmp.ne.s32.totalorder %s344, %s360
      %p362 = scmp.eq.s32.totalorder %s38, 0
      %p363 = por %p361, %p362
      %s364 = ssub.s32 %s40, %s47
      %p365 = scmp.eq.s32.totalorder %s364, 0
      %s367 = sadd.s32 %s366, 1
      %s368 = scalar_select %p365, %s366, %s367
      %p371 = pneg %p365
      %p372 = scmp.eq.s32.totalorder %s32, 3
      %p373 = por %p371, %p372
      %p374 = scmp.ne.s32.totalorder %s366, %s369
      %p375 = scmp.eq.s32.totalorder %s32, 0
      %p376 = por %p374, %p375
      %p377 = scmp.ne.s32.totalorder %s366, %s369
      %p378 = scmp.eq.s32.totalorder %s37, 3
      %p379 = por %p377, %p378
      %p380 = scmp.ne.s32.totalorder %s369, %s370
      %p381 = scmp.eq.s32.totalorder %s37, 0
      %p382 = por %p380, %p381
      %p383 = scmp.ne.s32.totalorder %s369, %s370
      %p384 = scmp.eq.s32.totalorder %s38, 3
      %p385 = por %p383, %p384
      %p387 = scmp.ne.s32.totalorder %s370, %s386
      %p388 = scmp.eq.s32.totalorder %s38, 0
      %p389 = por %p387, %p388
      %s390 = ssub.s32 %s40, %s47
      %p391 = scmp.eq.s32.totalorder %s390, 0
      %s393 = sadd.s32 %s392, 1
      %s394 = scalar_select %p391, %s392, %s393
      %p397 = pneg %p391
      %p398 = scmp.eq.s32.totalorder %s32, 3
      %p399 = por %p397, %p398
      %p400 = scmp.ne.s32.totalorder %s392, %s395
      %p401 = scmp.eq.s32.totalorder %s32, 0
      %p402 = por %p400, %p401
      %p403 = scmp.ne.s32.totalorder %s392, %s395
      %p404 = scmp.eq.s32.totalorder %s37, 3
      %p405 = por %p403, %p404
      %p406 = scmp.ne.s32.totalorder %s395, %s396
      %p407 = scmp.eq.s32.totalorder %s37, 0
      %p408 = por %p406, %p407
      %p409 = scmp.ne.s32.totalorder %s395, %s396
      %p410 = scmp.eq.s32.totalorder %s38, 3
      %p411 = por %p409, %p410
      %p413 = scmp.ne.s32.totalorder %s396, %s412
      %p414 = scmp.eq.s32.totalorder %s38, 0
      %p415 = por %p413, %p414
      %s416 = ssub.s32 %s39, %s51
      %p417 = scmp.eq.s32.totalorder %s416, 0
      %s419 = sadd.s32 %s418, 1
      %s420 = scalar_select %p417, %s418, %s419
      %p423 = pneg %p417
      %p424 = scmp.eq.s32.totalorder %s32, 3
      %p425 = por %p423, %p424
      %p426 = scmp.ne.s32.totalorder %s418, %s421
      %p427 = scmp.eq.s32.totalorder %s32, 0
      %p428 = por %p426, %p427
      %p429 = scmp.ne.s32.totalorder %s418, %s421
      %p430 = scmp.eq.s32.totalorder %s37, 3
      %p431 = por %p429, %p430
      %p432 = scmp.ne.s32.totalorder %s421, %s422
      %p433 = scmp.eq.s32.totalorder %s37, 0
      %p434 = por %p432, %p433
      %p435 = scmp.ne.s32.totalorder %s421, %s422
      %p436 = scmp.eq.s32.totalorder %s38, 3
      %p437 = por %p435, %p436
      %p439 = scmp.ne.s32.totalorder %s422, %s438
      %p440 = scmp.eq.s32.totalorder %s38, 0
      %p441 = por %p439, %p440
      %p442 = scmp.le.s32.totalorder 1, %s32
      %p443 = scmp.lt.s32.totalorder %s32, 5
      %p444 = pnand %p442, %p443
      %p445 = pneg %p444
      // Predicated region
      $region9: #{tpu_custom_call.1} parent=5 // pred_check
        _
      $region10: #{tpu_custom_call.1} parent=5 // pred_check_branch
        %447 = sbr.rel (%p444) target = $region12
      $region11: #{tpu_custom_call.1} parent=5 // pred_region
        %s448 = ssub.s32 %s32, 1
      $region12: #{tpu_custom_call.1} parent=5 // pred_fallthru
        _
      %p449 = scmp.lt.s32.totalorder %s32, 4
      // Predicated region
      $region13: #{tpu_custom_call.1} parent=5 // pred_check
        %p450 = pneg %p449
      $region14: #{tpu_custom_call.1} parent=5 // pred_check_branch
        %452 = sbr.rel (%p450) target = $region16
      $region15: #{tpu_custom_call.1} parent=5 // pred_region
        // Predicated region
        $region17: #{tpu_custom_call.1} parent=15 // pred_check
          %p453 = pneg %p64
        $region18: #{tpu_custom_call.1} parent=15 // pred_check_branch
          %455 = sbr.rel (%p453) target = $region20
        $region19: #{tpu_custom_call.1} parent=15 // pred_region
          %s456 = sand.u32 %s54, 1
          %s457 = scalar_lea.sflag [#allocation4], %s456
          %s458 = sand.u32 %s54, 1
          %s459 = smul.addr %s458, 8
          %s460 = scalar_lea.vmem [#allocation3], %s459
          %462 = vsyncadd %s457, 0
          %s463 = smul.addr %s39, 8
          %s464 = scalar_lea.hbm %s0, %s463
          %s466 = sshll.u32 %s464, 4
          %s467 = int_to_ptr.hbm [resolvable:$true] %s466
          %s468 = sshll.u32 %s460, 4
          %s469 = int_to_ptr.vmem [resolvable:$true] %s468
          %471 = dma.hbm_to_vmem [thread:$0]  %s467, 128, %s469, %s457
        $region20: #{tpu_custom_call.1} parent=15 // pred_fallthru
          _
        // Predicated region
        $region21: #{tpu_custom_call.1} parent=15 // pred_check
          %p472 = pneg %p90
        $region22: #{tpu_custom_call.1} parent=15 // pred_check_branch
          %474 = sbr.rel (%p472) target = $region24
        $region23: #{tpu_custom_call.1} parent=15 // pred_region
          %s475 = sand.u32 %s32, 1
          %s476 = scalar_lea.sflag [#allocation7], %s475
          %s477 = sand.u32 %s80, 1
          %s478 = smul.addr %s477, 4
          %s479 = scalar_lea.vmem [#allocation6], %s478
          %481 = vsyncadd %s476, 0
          %s482 = smul.addr %s39, 4
          %s483 = scalar_lea.hbm %s1, %s482
          %s485 = sshll.u32 %s483, 4
          %s486 = int_to_ptr.hbm [resolvable:$true] %s485
          %s487 = sshll.u32 %s479, 4
          %s488 = int_to_ptr.vmem [resolvable:$true] %s487
          %490 = dma.hbm_to_vmem [thread:$0]  %s486, 64, %s488, %s476
        $region24: #{tpu_custom_call.1} parent=15 // pred_fallthru
          _
        // Predicated region
        $region25: #{tpu_custom_call.1} parent=15 // pred_check
          %p491 = pneg %p116
        $region26: #{tpu_custom_call.1} parent=15 // pred_check_branch
          %493 = sbr.rel (%p491) target = $region28
        $region27: #{tpu_custom_call.1} parent=15 // pred_region
          %p494 = scmp.lt.s32.totalorder %s40, 1
          %s495 = scalar_select %p494, %s40, 1
          %s496 = smul.addr %s495, 4
          %s497 = smul.addr %s496, 8
          %s498 = scalar_lea.vmem %s2, %s497
        $region28: #{tpu_custom_call.1} parent=15 // pred_fallthru
          _
        // Predicated region
        $region29: #{tpu_custom_call.1} parent=15 // pred_check
          %p499 = pneg %p142
        $region30: #{tpu_custom_call.1} parent=15 // pred_check_branch
          %501 = sbr.rel (%p499) target = $region32
        $region31: #{tpu_custom_call.1} parent=15 // pred_region
          %p502 = scmp.lt.s32.totalorder %s40, 1
          %s503 = scalar_select %p502, %s40, 1
          %s504 = scalar_lea.vmem %s3, %s503
        $region32: #{tpu_custom_call.1} parent=15 // pred_fallthru
          _
        // Predicated region
        $region33: #{tpu_custom_call.1} parent=15 // pred_check
          %p505 = pneg %p168
        $region34: #{tpu_custom_call.1} parent=15 // pred_check_branch
          %507 = sbr.rel (%p505) target = $region36
        $region35: #{tpu_custom_call.1} parent=15 // pred_region
          %p508 = scmp.lt.s32.totalorder %s40, 1
          %s509 = scalar_select %p508, %s40, 1
          %s510 = smul.addr %s509, 4
          %s511 = smul.addr %s510, 8
          %s512 = scalar_lea.vmem %s4, %s511
        $region36: #{tpu_custom_call.1} parent=15 // pred_fallthru
          _
        // Predicated region
        $region37: #{tpu_custom_call.1} parent=15 // pred_check
          %p513 = pneg %p194
        $region38: #{tpu_custom_call.1} parent=15 // pred_check_branch
          %515 = sbr.rel (%p513) target = $region40
        $region39: #{tpu_custom_call.1} parent=15 // pred_region
          %s516 = sand.u32 %s32, 1
          %s517 = scalar_lea.sflag [#allocation7], %s516
          %s518 = sand.u32 %s184, 1
          %s519 = scalar_lea.vmem [#allocation8], %s518
          %521 = vsyncadd %s517, 0
          %s522 = scalar_lea.hbm %s5, %s40
          %s524 = sshll.u32 %s522, 4
          %s525 = int_to_ptr.hbm [resolvable:$true] %s524
          %s526 = sshll.u32 %s519, 4
          %s527 = int_to_ptr.vmem [resolvable:$true] %s526
          %529 = dma.hbm_to_vmem [thread:$0]  %s525, 16, %s527, %s517
        $region40: #{tpu_custom_call.1} parent=15 // pred_fallthru
          _
        // Predicated region
        $region41: #{tpu_custom_call.1} parent=15 // pred_check
          %p530 = pneg %p220
        $region42: #{tpu_custom_call.1} parent=15 // pred_check_branch
          %532 = sbr.rel (%p530) target = $region44
        $region43: #{tpu_custom_call.1} parent=15 // pred_region
          %p533 = scmp.lt.s32.totalorder %s40, 1
          %s534 = scalar_select %p533, %s40, 1
          %s535 = scalar_lea.vmem %s6, %s534
        $region44: #{tpu_custom_call.1} parent=15 // pred_fallthru
          _
        // Predicated region
        $region45: #{tpu_custom_call.1} parent=15 // pred_check
          %p536 = pneg %p246
        $region46: #{tpu_custom_call.1} parent=15 // pred_check_branch
          %538 = sbr.rel (%p536) target = $region48
        $region47: #{tpu_custom_call.1} parent=15 // pred_region
          %s539 = sand.u32 %s32, 1
          %s540 = scalar_lea.sflag [#allocation10], %s539
          %s541 = sand.u32 %s236, 1
          %s542 = scalar_lea.vmem [#allocation9], %s541
          %544 = vsyncadd %s540, 0
          %s545 = scalar_lea.hbm %s7, %s40
          %s547 = sshll.u32 %s545, 4
          %s548 = int_to_ptr.hbm [resolvable:$true] %s547
          %s549 = sshll.u32 %s542, 4
          %s550 = int_to_ptr.vmem [resolvable:$true] %s549
          %552 = dma.hbm_to_vmem [thread:$0]  %s548, 16, %s550, %s540
        $region48: #{tpu_custom_call.1} parent=15 // pred_fallthru
          _
        // Predicated region
        $region49: #{tpu_custom_call.1} parent=15 // pred_check
          %p553 = pneg %p272
        $region50: #{tpu_custom_call.1} parent=15 // pred_check_branch
          %555 = sbr.rel (%p553) target = $region52
        $region51: #{tpu_custom_call.1} parent=15 // pred_region
          %p556 = scmp.lt.s32.totalorder %s40, 1
          %s557 = scalar_select %p556, %s40, 1
          %s558 = smul.addr %s557, 4
          %s559 = smul.addr %s558, 8
          %s560 = scalar_lea.vmem %s8, %s559
        $region52: #{tpu_custom_call.1} parent=15 // pred_fallthru
          _
        // Predicated region
        $region53: #{tpu_custom_call.1} parent=15 // pred_check
          %p561 = pneg %p298
        $region54: #{tpu_custom_call.1} parent=15 // pred_check_branch
          %563 = sbr.rel (%p561) target = $region56
        $region55: #{tpu_custom_call.1} parent=15 // pred_region
          %p564 = scmp.lt.s32.totalorder %s40, 1
          %s565 = scalar_select %p564, %s40, 1
          %s566 = scalar_lea.vmem %s9, %s565
        $region56: #{tpu_custom_call.1} parent=15 // pred_fallthru
          _
        // Predicated region
        $region57: #{tpu_custom_call.1} parent=15 // pred_check
          %p567 = pneg %p324
        $region58: #{tpu_custom_call.1} parent=15 // pred_check_branch
          %569 = sbr.rel (%p567) target = $region60
        $region59: #{tpu_custom_call.1} parent=15 // pred_region
          %p570 = scmp.lt.s32.totalorder %s40, 1
          %s571 = scalar_select %p570, %s40, 1
          %s572 = smul.addr %s571, 8
          %s573 = smul.addr %s572, 8
          %s574 = scalar_lea.vmem %s10, %s573
        $region60: #{tpu_custom_call.1} parent=15 // pred_fallthru
          _
        // Predicated region
        $region61: #{tpu_custom_call.1} parent=15 // pred_check
          %p575 = pneg %p350
        $region62: #{tpu_custom_call.1} parent=15 // pred_check_branch
          %577 = sbr.rel (%p575) target = $region64
        $region63: #{tpu_custom_call.1} parent=15 // pred_region
          %p578 = scmp.lt.s32.totalorder %s40, 1
          %s579 = scalar_select %p578, %s40, 1
          %s580 = scalar_lea.vmem %s11, %s579
        $region64: #{tpu_custom_call.1} parent=15 // pred_fallthru
          _
        // Predicated region
        $region65: #{tpu_custom_call.1} parent=15 // pred_check
          %p581 = pneg %p376
        $region66: #{tpu_custom_call.1} parent=15 // pred_check_branch
          %583 = sbr.rel (%p581) target = $region68
        $region67: #{tpu_custom_call.1} parent=15 // pred_region
          %p584 = scmp.lt.s32.totalorder %s40, 1
          %s585 = scalar_select %p584, %s40, 1
          %s586 = scalar_lea.vmem %s12, %s585
        $region68: #{tpu_custom_call.1} parent=15 // pred_fallthru
          _
        // Predicated region
        $region69: #{tpu_custom_call.1} parent=15 // pred_check
          %p587 = pneg %p402
        $region70: #{tpu_custom_call.1} parent=15 // pred_check_branch
          %589 = sbr.rel (%p587) target = $region72
        $region71: #{tpu_custom_call.1} parent=15 // pred_region
          %s590 = sand.u32 %s32, 1
          %s591 = scalar_lea.sflag [#allocation10], %s590
          %s592 = sand.u32 %s392, 1
          %s593 = scalar_lea.vmem [#allocation11], %s592
          %595 = vsyncadd %s591, 0
          %s596 = scalar_lea.hbm %s13, %s40
          %s598 = sshll.u32 %s596, 4
          %s599 = int_to_ptr.hbm [resolvable:$true] %s598
          %s600 = sshll.u32 %s593, 4
          %s601 = int_to_ptr.vmem [resolvable:$true] %s600
          %603 = dma.hbm_to_vmem [thread:$0]  %s599, 16, %s601, %s591
        $region72: #{tpu_custom_call.1} parent=15 // pred_fallthru
          _
      $region16: #{tpu_custom_call.1} parent=5 // pred_fallthru
        _
      %p604 = scmp.le.s32.totalorder 1, %s32
      %p605 = scmp.lt.s32.totalorder %s32, 5
      %p606 = pnand %p604, %p605
      %p607 = pneg %p606
      // Predicated region
      $region73: #{tpu_custom_call.1} parent=5 // pred_check
        _
      $region74: #{tpu_custom_call.1} parent=5 // pred_check_branch
        %609 = sbr.rel (%p606) target = $region76
      $region75: #{tpu_custom_call.1} parent=5 // pred_region
        %s610 = ssub.s32 %s32, 1
        %s611 = sand.u32 %s57, 1
        %s612 = scalar_lea.sflag [#allocation4], %s611
        %s613 = sand.u32 %s57, 1
        %s614 = smul.addr %s613, 8
        %s615 = scalar_lea.vmem [#allocation3], %s614
        // Predicated region
        $region77: #{tpu_custom_call.1} parent=75 // pred_check
          %p616 = pneg %p70
        $region78: #{tpu_custom_call.1} parent=75 // pred_check_branch
          %618 = sbr.rel (%p616) target = $region80
        $region79: #{tpu_custom_call.1} parent=75 // pred_region
          %620 = dma.done %s612, 128
        $region80: #{tpu_custom_call.1} parent=75 // pred_fallthru
          _
        %s621 = sand.u32 %s37, 1
        %s622 = scalar_lea.sflag [#allocation7], %s621
        %s623 = sand.u32 %s83, 1
        %s624 = smul.addr %s623, 4
        %s625 = scalar_lea.vmem [#allocation6], %s624
        // Predicated region
        $region81: #{tpu_custom_call.1} parent=75 // pred_check
          %p626 = pneg %p96
        $region82: #{tpu_custom_call.1} parent=75 // pred_check_branch
          %628 = sbr.rel (%p626) target = $region84
        $region83: #{tpu_custom_call.1} parent=75 // pred_region
          %630 = dma.done %s622, 64
        $region84: #{tpu_custom_call.1} parent=75 // pred_fallthru
          _
        %s631 = sand.u32 %s37, 1
        %s632 = scalar_lea.sflag [#allocation7], %s631
        %s633 = sand.u32 %s187, 1
        %s634 = scalar_lea.vmem [#allocation8], %s633
        // Predicated region
        $region85: #{tpu_custom_call.1} parent=75 // pred_check
          %p635 = pneg %p200
        $region86: #{tpu_custom_call.1} parent=75 // pred_check_branch
          %637 = sbr.rel (%p635) target = $region88
        $region87: #{tpu_custom_call.1} parent=75 // pred_region
          %639 = dma.done %s632, 16
        $region88: #{tpu_custom_call.1} parent=75 // pred_fallthru
          _
        %s640 = sand.u32 %s37, 1
        %s641 = scalar_lea.sflag [#allocation10], %s640
        %s642 = sand.u32 %s239, 1
        %s643 = scalar_lea.vmem [#allocation9], %s642
        // Predicated region
        $region89: #{tpu_custom_call.1} parent=75 // pred_check
          %p644 = pneg %p252
        $region90: #{tpu_custom_call.1} parent=75 // pred_check_branch
          %646 = sbr.rel (%p644) target = $region92
        $region91: #{tpu_custom_call.1} parent=75 // pred_region
          %648 = dma.done %s641, 16
        $region92: #{tpu_custom_call.1} parent=75 // pred_fallthru
          _
        %s649 = sand.u32 %s37, 1
        %s650 = scalar_lea.sflag [#allocation10], %s649
        %s651 = sand.u32 %s395, 1
        %s652 = scalar_lea.vmem [#allocation11], %s651
        // Predicated region
        $region93: #{tpu_custom_call.1} parent=75 // pred_check
          %p653 = pneg %p408
        $region94: #{tpu_custom_call.1} parent=75 // pred_check_branch
          %655 = sbr.rel (%p653) target = $region96
        $region95: #{tpu_custom_call.1} parent=75 // pred_region
          %657 = dma.done %s650, 16
        $region96: #{tpu_custom_call.1} parent=75 // pred_fallthru
          _
        %s658 = sand.u32 %s57, 1
        %s659 = scalar_lea.sflag [#allocation4], %s658
        %s660 = sand.u32 %s57, 1
        %s661 = smul.addr %s660, 8
        %s662 = scalar_lea.vmem [#allocation3], %s661
        %p663 = pneg %p70
        %p664 = pneg %p67
        %s665 = sand.u32 %s37, 1
        %s666 = scalar_lea.sflag [#allocation7], %s665
        %s667 = sand.u32 %s83, 1
        %s668 = smul.addr %s667, 4
        %s669 = scalar_lea.vmem [#allocation6], %s668
        %p670 = pneg %p96
        %p671 = pneg %p93
        %p672 = scmp.lt.s32.totalorder %s42, 1
        %s673 = scalar_select %p672, %s42, 1
        %s674 = smul.addr %s673, 4
        %s675 = smul.addr %s674, 8
        %s676 = scalar_lea.vmem %s2, %s675
        %p677 = pneg %p122
        %p678 = pneg %p119
        %p679 = scmp.lt.s32.totalorder %s42, 1
        %s680 = scalar_select %p679, %s42, 1
        %s681 = scalar_lea.vmem %s3, %s680
        %p682 = pneg %p148
        %p683 = pneg %p145
        %p684 = scmp.lt.s32.totalorder %s42, 1
        %s685 = scalar_select %p684, %s42, 1
        %s686 = smul.addr %s685, 4
        %s687 = smul.addr %s686, 8
        %s688 = scalar_lea.vmem %s4, %s687
        %p689 = pneg %p174
        %p690 = pneg %p171
        %s691 = sand.u32 %s37, 1
        %s692 = scalar_lea.sflag [#allocation7], %s691
        %s693 = sand.u32 %s187, 1
        %s694 = scalar_lea.vmem [#allocation8], %s693
        %p695 = pneg %p200
        %p696 = pneg %p197
        %p697 = scmp.lt.s32.totalorder %s42, 1
        %s698 = scalar_select %p697, %s42, 1
        %s699 = scalar_lea.vmem %s6, %s698
        %p700 = pneg %p226
        %p701 = pneg %p223
        %s702 = sand.u32 %s37, 1
        %s703 = scalar_lea.sflag [#allocation10], %s702
        %s704 = sand.u32 %s239, 1
        %s705 = scalar_lea.vmem [#allocation9], %s704
        %p706 = pneg %p252
        %p707 = pneg %p249
        %p708 = scmp.lt.s32.totalorder %s42, 1
        %s709 = scalar_select %p708, %s42, 1
        %s710 = smul.addr %s709, 4
        %s711 = smul.addr %s710, 8
        %s712 = scalar_lea.vmem %s8, %s711
        %p713 = pneg %p278
        %p714 = pneg %p275
        %p715 = scmp.lt.s32.totalorder %s42, 1
        %s716 = scalar_select %p715, %s42, 1
        %s717 = scalar_lea.vmem %s9, %s716
        %p718 = pneg %p304
        %p719 = pneg %p301
        %p720 = scmp.lt.s32.totalorder %s42, 1
        %s721 = scalar_select %p720, %s42, 1
        %s722 = smul.addr %s721, 8
        %s723 = smul.addr %s722, 8
        %s724 = scalar_lea.vmem %s10, %s723
        %p725 = pneg %p330
        %p726 = pneg %p327
        %p727 = scmp.lt.s32.totalorder %s42, 1
        %s728 = scalar_select %p727, %s42, 1
        %s729 = scalar_lea.vmem %s11, %s728
        %p730 = pneg %p356
        %p731 = pneg %p353
        %p732 = scmp.lt.s32.totalorder %s42, 1
        %s733 = scalar_select %p732, %s42, 1
        %s734 = scalar_lea.vmem %s12, %s733
        %p735 = pneg %p382
        %p736 = pneg %p379
        %s737 = sand.u32 %s37, 1
        %s738 = scalar_lea.sflag [#allocation10], %s737
        %s739 = sand.u32 %s395, 1
        %s740 = scalar_lea.vmem [#allocation11], %s739
        %p741 = pneg %p408
        %p742 = pneg %p405
        %p743 = pneg %p434
        %p744 = pneg %p431
        %s745 = sand.u32 %s421, 1
        %s746 = scalar_lea.sflag [#allocation5], %s745
        %s747 = sand.u32 %s421, 1
        %s748 = smul.addr %s747, 8
        %s749 = scalar_lea.vmem [#allocation12], %s748
        %p750 = scmp.lt.s32.totalorder %s42, 1
        %s751 = scalar_select %p750, %s42, 1
        %s752 = smul.addr %s751, 4
        %s753 = smul.addr %s752, 8
        %s754 = scalar_lea.vmem %s2, %s753
        %p755 = scmp.lt.s32.totalorder %s42, 1
        %s756 = scalar_select %p755, %s42, 1
        %s757 = scalar_lea.vmem %s3, %s756
        %p758 = scmp.lt.s32.totalorder %s42, 1
        %s759 = scalar_select %p758, %s42, 1
        %s760 = smul.addr %s759, 4
        %s761 = smul.addr %s760, 8
        %s762 = scalar_lea.vmem %s4, %s761
        %p763 = scmp.lt.s32.totalorder %s42, 1
        %s764 = scalar_select %p763, %s42, 1
        %s765 = scalar_lea.vmem %s6, %s764
        %p766 = scmp.lt.s32.totalorder %s42, 1
        %s767 = scalar_select %p766, %s42, 1
        %s768 = smul.addr %s767, 4
        %s769 = smul.addr %s768, 8
        %s770 = scalar_lea.vmem %s8, %s769
        %p771 = scmp.lt.s32.totalorder %s42, 1
        %s772 = scalar_select %p771, %s42, 1
        %s773 = scalar_lea.vmem %s9, %s772
        %p774 = scmp.lt.s32.totalorder %s42, 1
        %s775 = scalar_select %p774, %s42, 1
        %s776 = smul.addr %s775, 8
        %s777 = smul.addr %s776, 8
        %s778 = scalar_lea.vmem %s10, %s777
        %p779 = scmp.lt.s32.totalorder %s42, 1
        %s780 = scalar_select %p779, %s42, 1
        %s781 = scalar_lea.vmem %s11, %s780
        %p782 = scmp.lt.s32.totalorder %s42, 1
        %s783 = scalar_select %p782, %s42, 1
        %s784 = scalar_lea.vmem %s12, %s783
        %p785 = scmp.eq.s32.totalorder %s42, 0
        // Predicated region
        $region97: #{tpu_custom_call.1} parent=75 // pred_check
          %p786 = pneg %p785
        $region98: #{tpu_custom_call.1} parent=75 // pred_check_branch
          %788 = sbr.rel (%p786) target = $region100
        $region99: #{tpu_custom_call.1} parent=75 // pred_region
          %v789 = vld [vmem:[%s615] sm:$0xff]
          %vm790 = vcmask 261120
          %791 = vst.msk [vmem:[#allocation2] sm:$0xff] %vm790, %v789
          %v792 = vld [vmem:[%s625] sm:$0xf]
          %vm793 = vcmask 257024
          %794 = vst.msk [vmem:[#allocation2 + $0x8] sm:$0xf] %vm793, %v792
        $region100: #{tpu_custom_call.1} parent=75 // pred_fallthru
          _
        %v795 = vld [vmem:[#allocation2] sm:$0xff]
        %v796 = vld [vmem:[#allocation2 + $0x8] sm:$0xf]
        %v797 = vld [vmem:[%s754] sm:$0xff]
        %v798 = vld [vmem:[%s754 + $0x8] sm:$0xff]
        %v799 = vld [vmem:[%s754 + $0x10] sm:$0xff]
        %v800 = vld [vmem:[%s754 + $0x18] sm:$0xff]
        %v801 = vld [vmem:[%s757] sm:$0x1]
        %v803 = vperm.slane %v801, 0
        %vm805 = vcmask 261120
        %v807 = vsel %vm805, %v795, 0
        %v810 = vsel %vm805, %v796, 0
        %812 = vmatpush.msra.mxu0 0.0
        %813 = vmatpush.msra.mxu0 0.0
        %814 = vmatpush.msra.mxu0 0.0
        %815 = vmatpush.msra.mxu0 0.0
        %816 = vmatpush.msra.mxu0 0.0
        %817 = vmatpush.msra.mxu0 0.0
        %818 = vmatpush.msra.mxu0 0.0
        %819 = vmatpush.msra.mxu0 0.0
        %820 = vmatpush.msra.mxu0 0.0
        %821 = vmatpush.msra.mxu0 0.0
        %822 = vmatpush.msra.mxu0 0.0
        %823 = vmatpush.msra.mxu0 0.0
        %824 = vmatpush.msra.mxu0 %v800
        %825 = vmatpush.msra.mxu0 %v799
        %826 = vmatpush.msra.mxu0 %v798
        %827 = vmatpush.msra.mxu0 %v797
        %828 = vmatmul.f32.gmra.mxu0 %v807
        %v829 = vpop.f32.mrf.mxu0
        %v830 = vadd.f32 %v803, %v829
        %831 = vmatmul.f32.gmra.mxu0 %v810
        %v832 = vpop.f32.mrf.mxu0
        %v833 = vadd.f32 %v803, %v832
        %834 = vdwg.mxu0
        %v835 = vld [vmem:[%s762] sm:$0xff]
        %v836 = vld [vmem:[%s762 + $0x8] sm:$0xff]
        %v837 = vld [vmem:[%s762 + $0x10] sm:$0xff]
        %v838 = vld [vmem:[%s762 + $0x18] sm:$0xff]
        %v839 = vmul.f32 %v830, 0.35355338
        %v840 = vmul.f32 %v833, 0.35355338
        %843 = vrot.lane.b32.xlu0 %v830, 96
        %v844 = vpop.permute.xlu0 %843
        %845 = vrot.lane.b32.xlu0 %v833, 96
        %v846 = vpop.permute.xlu0 %845
        %vm847 = vcmask 64512
        %v849 = vsel %vm847, %v839, 0
        %v852 = vsel %vm847, %v840, 0
        %v854 = vsel %vm847, %v844, 0
        %v856 = vsel %vm847, %v846, 0
        %858 = vmatpush.xpose.msra.mxu0 0.0
        %859 = vmatpush.xpose.msra.mxu0 0.0
        %860 = vmatpush.xpose.msra.mxu0 0.0
        %861 = vmatpush.xpose.msra.mxu0 0.0
        %862 = vmatpush.xpose.msra.mxu0 0.0
        %863 = vmatpush.xpose.msra.mxu0 0.0
        %864 = vmatpush.xpose.msra.mxu0 0.0
        %865 = vmatpush.xpose.msra.mxu0 0.0
        %866 = vmatpush.xpose.msra.mxu0 0.0
        %867 = vmatpush.xpose.msra.mxu0 0.0
        %868 = vmatpush.xpose.msra.mxu0 0.0
        %869 = vmatpush.xpose.msra.mxu0 0.0
        %870 = vmatpush.xpose.msra.mxu0 0.0
        %871 = vmatpush.xpose.msra.mxu0 0.0
        %872 = vmatpush.xpose.msra.mxu0 %v856
        %873 = vmatpush.xpose.msra.mxu0 %v854
        %874 = vmatmul.f32.gmra.mxu0 %v849
        %v875 = vpop.f32.mrf.mxu0
        %v876 = vadd.f32 0.0, %v875
        %877 = vmatmul.f32.gmra.mxu0 %v852
        %v878 = vpop.f32.mrf.mxu0
        %v879 = vadd.f32 0.0, %v878
        %880 = vdwg.mxu0
        %vm881 = vcmask 97280
        %v882 = vsel %vm881, %v876, -inf
        %883 = vmax.xlane.f32.xlu0 %v882
        %v884 = vpop.xlane.xlu0 %883
        %vm885 = vcmask 93184
        %v886 = vsel %vm885, %v879, -inf
        %887 = vmax.xlane.f32.xlu0 %v886
        %v888 = vpop.xlane.xlu0 %887
        %v889 = vsub.f32 %v876, %v884
        %v890 = vsub.f32 %v879, %v888
        %v891 = vmul.f32 %v889, 1.442695
        %v892 = vpow.pop %v891
        %v893 = vmul.f32 %v890, 1.442695
        %v894 = vpow.pop %v893
        %v895 = vsel %vm881, %v892, 0.0
        %896 = vadd.xlane.f32.xlu0 %v895
        %v897 = vpop.xlane.xlu0 %896
        %v898 = vsel %vm885, %v894, 0.0
        %899 = vadd.xlane.f32.xlu0 %v898
        %v900 = vpop.xlane.xlu0 %899
        %v901 = vrcp.pop %v897
        %v902 = vrcp.pop %v900
        %v903 = vmul.f32 %v892, %v901
        %v904 = vmul.f32 %v894, %v902
        %905 = vrot.lane.b32.xlu0 %v830, 64
        %v906 = vpop.permute.xlu0 %905
        %907 = vrot.lane.b32.xlu0 %v833, 64
        %v908 = vpop.permute.xlu0 %907
        %v911 = vsel %vm881, %v903, 0
        %v914 = vsel %vm881, %v904, 0
        %vm916 = vcmask 1043456
        %v917 = vsel %vm916, %v908, 0
        %919 = vmatpush.msra.mxu0 0.0
        %920 = vmatpush.msra.mxu0 0.0
        %921 = vmatpush.msra.mxu0 0.0
        %922 = vmatpush.msra.mxu0 0.0
        %923 = vmatpush.msra.mxu0 0.0
        %924 = vmatpush.msra.mxu0 0.0
        %925 = vmatpush.msra.mxu0 0.0
        %926 = vmatpush.msra.mxu0 0.0
        %927 = vmatpush.msra.mxu0 0.0
        %928 = vmatpush.msra.mxu0 0.0
        %929 = vmatpush.msra.mxu0 0.0
        %930 = vmatpush.msra.mxu0 0.0
        %931 = vmatpush.msra.mxu0 0.0
        %932 = vmatpush.msra.mxu0 0.0
        %933 = vmatpush.msra.mxu0 %v917
        %934 = vmatpush.msra.mxu0 %v906
        %935 = vmatmul.f32.gmra.mxu0 %v911
        %v936 = vpop.f32.mrf.mxu0
        %v937 = vadd.f32 0.0, %v936
        %938 = vmatmul.f32.gmra.mxu0 %v914
        %v939 = vpop.f32.mrf.mxu0
        %v940 = vadd.f32 0.0, %v939
        %941 = vdwg.mxu0
        %942 = vrot.lane.b32.xlu0 %v839, 120
        %v943 = vpop.permute.xlu0 %942
        %944 = vrot.lane.b32.xlu0 %v840, 120
        %v945 = vpop.permute.xlu0 %944
        %946 = vrot.lane.b32.xlu0 %v830, 88
        %v947 = vpop.permute.xlu0 %946
        %948 = vrot.lane.b32.xlu0 %v833, 88
        %v949 = vpop.permute.xlu0 %948
        %v950 = vsel %vm847, %v943, 0
        %v952 = vsel %vm847, %v945, 0
        %v954 = vsel %vm847, %v947, 0
        %v956 = vsel %vm847, %v949, 0
        %958 = vmatpush.xpose.msra.mxu0 0.0
        %959 = vmatpush.xpose.msra.mxu0 0.0
        %960 = vmatpush.xpose.msra.mxu0 0.0
        %961 = vmatpush.xpose.msra.mxu0 0.0
        %962 = vmatpush.xpose.msra.mxu0 0.0
        %963 = vmatpush.xpose.msra.mxu0 0.0
        %964 = vmatpush.xpose.msra.mxu0 0.0
        %965 = vmatpush.xpose.msra.mxu0 0.0
        %966 = vmatpush.xpose.msra.mxu0 0.0
        %967 = vmatpush.xpose.msra.mxu0 0.0
        %968 = vmatpush.xpose.msra.mxu0 0.0
        %969 = vmatpush.xpose.msra.mxu0 0.0
        %970 = vmatpush.xpose.msra.mxu0 0.0
        %971 = vmatpush.xpose.msra.mxu0 0.0
        %972 = vmatpush.xpose.msra.mxu0 %v956
        %973 = vmatpush.xpose.msra.mxu0 %v954
        %974 = vmatmul.f32.gmra.mxu0 %v950
        %v975 = vpop.f32.mrf.mxu0
        %v976 = vadd.f32 0.0, %v975
        %977 = vmatmul.f32.gmra.mxu0 %v952
        %v978 = vpop.f32.mrf.mxu0
        %v979 = vadd.f32 0.0, %v978
        %980 = vdwg.mxu0
        %v981 = vsel %vm881, %v976, -inf
        %982 = vmax.xlane.f32.xlu0 %v981
        %v983 = vpop.xlane.xlu0 %982
        %v984 = vsel %vm885, %v979, -inf
        %985 = vmax.xlane.f32.xlu0 %v984
        %v986 = vpop.xlane.xlu0 %985
        %v987 = vsub.f32 %v976, %v983
        %v988 = vsub.f32 %v979, %v986
        %v989 = vmul.f32 %v987, 1.442695
        %v990 = vpow.pop %v989
        %v991 = vmul.f32 %v988, 1.442695
        %v992 = vpow.pop %v991
        %v993 = vsel %vm881, %v990, 0.0
        %994 = vadd.xlane.f32.xlu0 %v993
        %v995 = vpop.xlane.xlu0 %994
        %v996 = vsel %vm885, %v992, 0.0
        %997 = vadd.xlane.f32.xlu0 %v996
        %v998 = vpop.xlane.xlu0 %997
        %v999 = vrcp.pop %v995
        %v1000 = vrcp.pop %v998
        %v1001 = vmul.f32 %v990, %v999
        %v1002 = vmul.f32 %v992, %v1000
        %1003 = vrot.lane.b32.xlu0 %v830, 56
        %v1004 = vpop.permute.xlu0 %1003
        %1005 = vrot.lane.b32.xlu0 %v833, 56
        %v1006 = vpop.permute.xlu0 %1005
        %v1009 = vsel %vm881, %v1001, 0
        %v1012 = vsel %vm881, %v1002, 0
        %v1014 = vsel %vm916, %v1006, 0
        %1016 = vmatpush.msra.mxu0 0.0
        %1017 = vmatpush.msra.mxu0 0.0
        %1018 = vmatpush.msra.mxu0 0.0
        %1019 = vmatpush.msra.mxu0 0.0
        %1020 = vmatpush.msra.mxu0 0.0
        %1021 = vmatpush.msra.mxu0 0.0
        %1022 = vmatpush.msra.mxu0 0.0
        %1023 = vmatpush.msra.mxu0 0.0
        %1024 = vmatpush.msra.mxu0 0.0
        %1025 = vmatpush.msra.mxu0 0.0
        %1026 = vmatpush.msra.mxu0 0.0
        %1027 = vmatpush.msra.mxu0 0.0
        %1028 = vmatpush.msra.mxu0 0.0
        %1029 = vmatpush.msra.mxu0 0.0
        %1030 = vmatpush.msra.mxu0 %v1014
        %1031 = vmatpush.msra.mxu0 %v1004
        %1032 = vmatmul.f32.gmra.mxu0 %v1009
        %v1033 = vpop.f32.mrf.mxu0
        %v1034 = vadd.f32 0.0, %v1033
        %1035 = vmatmul.f32.gmra.mxu0 %v1012
        %v1036 = vpop.f32.mrf.mxu0
        %v1037 = vadd.f32 0.0, %v1036
        %1038 = vdwg.mxu0
        %v1040 = vsel %vm847, %v1034, 0
        %v1043 = vsel %vm847, %v1037, 0
        %1045 = vmatpush.msra.mxu0 0.0
        %1046 = vmatpush.msra.mxu0 0.0
        %1047 = vmatpush.msra.mxu0 0.0
        %1048 = vmatpush.msra.mxu0 0.0
        %1049 = vmatpush.msra.mxu0 0.0
        %1050 = vmatpush.msra.mxu0 0.0
        %1051 = vmatpush.msra.mxu0 0.0
        %1052 = vmatpush.msra.mxu0 0.0
        %1053 = vmatpush.msra.mxu0 0.0
        %1054 = vmatpush.msra.mxu0 0.0
        %1055 = vmatpush.msra.mxu0 0.0
        %1056 = vmatpush.msra.mxu0 0.0
        %1057 = vmatpush.msra.mxu0 0.0
        %1058 = vmatpush.msra.mxu0 0.0
        %1059 = vmatpush.msra.mxu0 0.0
        %1060 = vmatpush.msra.mxu0 %v836
        %1061 = vmatmul.f32.gmra.mxu0 %v1040
        %v1062 = vpop.f32.mrf.mxu0
        %v1063 = vadd.f32 0.0, %v1062
        %1064 = vmatmul.f32.gmra.mxu0 %v1043
        %v1065 = vpop.f32.mrf.mxu0
        %v1066 = vadd.f32 0.0, %v1065
        %1067 = vdwg.mxu0
        %v1069 = vsel %vm847, %v937, 0
        %v1072 = vsel %vm847, %v940, 0
        %1074 = vmatpush.msra.mxu0 0.0
        %1075 = vmatpush.msra.mxu0 0.0
        %1076 = vmatpush.msra.mxu0 0.0
        %1077 = vmatpush.msra.mxu0 0.0
        %1078 = vmatpush.msra.mxu0 0.0
        %1079 = vmatpush.msra.mxu0 0.0
        %1080 = vmatpush.msra.mxu0 0.0
        %1081 = vmatpush.msra.mxu0 0.0
        %1082 = vmatpush.msra.mxu0 0.0
        %1083 = vmatpush.msra.mxu0 0.0
        %1084 = vmatpush.msra.mxu0 0.0
        %1085 = vmatpush.msra.mxu0 0.0
        %1086 = vmatpush.msra.mxu0 0.0
        %1087 = vmatpush.msra.mxu0 0.0
        %1088 = vmatpush.msra.mxu0 0.0
        %1089 = vmatpush.msra.mxu0 %v835
        %1090 = vmatmul.f32.gmra.mxu0 %v1069
        %v1091 = vpop.f32.mrf.mxu0
        %v1092 = vadd.f32 %v1063, %v1091
        %1093 = vmatmul.f32.gmra.mxu0 %v1072
        %v1094 = vpop.f32.mrf.mxu0
        %v1095 = vadd.f32 %v1066, %v1094
        %1096 = vdwg.mxu0
        %1097 = vrot.lane.b32.xlu0 %v839, 112
        %v1098 = vpop.permute.xlu0 %1097
        %1099 = vrot.lane.b32.xlu0 %v840, 112
        %v1100 = vpop.permute.xlu0 %1099
        %1101 = vrot.lane.b32.xlu0 %v830, 80
        %v1102 = vpop.permute.xlu0 %1101
        %1103 = vrot.lane.b32.xlu0 %v833, 80
        %v1104 = vpop.permute.xlu0 %1103
        %v1105 = vsel %vm847, %v1098, 0
        %v1107 = vsel %vm847, %v1100, 0
        %v1109 = vsel %vm847, %v1102, 0
        %v1111 = vsel %vm847, %v1104, 0
        %1113 = vmatpush.xpose.msra.mxu0 0.0
        %1114 = vmatpush.xpose.msra.mxu0 0.0
        %1115 = vmatpush.xpose.msra.mxu0 0.0
        %1116 = vmatpush.xpose.msra.mxu0 0.0
        %1117 = vmatpush.xpose.msra.mxu0 0.0
        %1118 = vmatpush.xpose.msra.mxu0 0.0
        %1119 = vmatpush.xpose.msra.mxu0 0.0
        %1120 = vmatpush.xpose.msra.mxu0 0.0
        %1121 = vmatpush.xpose.msra.mxu0 0.0
        %1122 = vmatpush.xpose.msra.mxu0 0.0
        %1123 = vmatpush.xpose.msra.mxu0 0.0
        %1124 = vmatpush.xpose.msra.mxu0 0.0
        %1125 = vmatpush.xpose.msra.mxu0 0.0
        %1126 = vmatpush.xpose.msra.mxu0 0.0
        %1127 = vmatpush.xpose.msra.mxu0 %v1111
        %1128 = vmatpush.xpose.msra.mxu0 %v1109
        %1129 = vmatmul.f32.gmra.mxu0 %v1105
        %v1130 = vpop.f32.mrf.mxu0
        %v1131 = vadd.f32 0.0, %v1130
        %1132 = vmatmul.f32.gmra.mxu0 %v1107
        %v1133 = vpop.f32.mrf.mxu0
        %v1134 = vadd.f32 0.0, %v1133
        %1135 = vdwg.mxu0
        %v1136 = vsel %vm881, %v1131, -inf
        %1137 = vmax.xlane.f32.xlu0 %v1136
        %v1138 = vpop.xlane.xlu0 %1137
        %v1139 = vsel %vm885, %v1134, -inf
        %1140 = vmax.xlane.f32.xlu0 %v1139
        %v1141 = vpop.xlane.xlu0 %1140
        %v1142 = vsub.f32 %v1131, %v1138
        %v1143 = vsub.f32 %v1134, %v1141
        %v1144 = vmul.f32 %v1142, 1.442695
        %v1145 = vpow.pop %v1144
        %v1146 = vmul.f32 %v1143, 1.442695
        %v1147 = vpow.pop %v1146
        %v1148 = vsel %vm881, %v1145, 0.0
        %1149 = vadd.xlane.f32.xlu0 %v1148
        %v1150 = vpop.xlane.xlu0 %1149
        %v1151 = vsel %vm885, %v1147, 0.0
        %1152 = vadd.xlane.f32.xlu0 %v1151
        %v1153 = vpop.xlane.xlu0 %1152
        %v1154 = vrcp.pop %v1150
        %v1155 = vrcp.pop %v1153
        %v1156 = vmul.f32 %v1145, %v1154
        %v1157 = vmul.f32 %v1147, %v1155
        %1158 = vrot.lane.b32.xlu0 %v830, 48
        %v1159 = vpop.permute.xlu0 %1158
        %1160 = vrot.lane.b32.xlu0 %v833, 48
        %v1161 = vpop.permute.xlu0 %1160
        %v1164 = vsel %vm881, %v1156, 0
        %v1167 = vsel %vm881, %v1157, 0
        %v1169 = vsel %vm916, %v1161, 0
        %1171 = vmatpush.msra.mxu0 0.0
        %1172 = vmatpush.msra.mxu0 0.0
        %1173 = vmatpush.msra.mxu0 0.0
        %1174 = vmatpush.msra.mxu0 0.0
        %1175 = vmatpush.msra.mxu0 0.0
        %1176 = vmatpush.msra.mxu0 0.0
        %1177 = vmatpush.msra.mxu0 0.0
        %1178 = vmatpush.msra.mxu0 0.0
        %1179 = vmatpush.msra.mxu0 0.0
        %1180 = vmatpush.msra.mxu0 0.0
        %1181 = vmatpush.msra.mxu0 0.0
        %1182 = vmatpush.msra.mxu0 0.0
        %1183 = vmatpush.msra.mxu0 0.0
        %1184 = vmatpush.msra.mxu0 0.0
        %1185 = vmatpush.msra.mxu0 %v1169
        %1186 = vmatpush.msra.mxu0 %v1159
        %1187 = vmatmul.f32.gmra.mxu0 %v1164
        %v1188 = vpop.f32.mrf.mxu0
        %v1189 = vadd.f32 0.0, %v1188
        %1190 = vmatmul.f32.gmra.mxu0 %v1167
        %v1191 = vpop.f32.mrf.mxu0
        %v1192 = vadd.f32 0.0, %v1191
        %1193 = vdwg.mxu0
        %v1195 = vsel %vm847, %v1189, 0
        %v1198 = vsel %vm847, %v1192, 0
        %1200 = vmatpush.msra.mxu0 0.0
        %1201 = vmatpush.msra.mxu0 0.0
        %1202 = vmatpush.msra.mxu0 0.0
        %1203 = vmatpush.msra.mxu0 0.0
        %1204 = vmatpush.msra.mxu0 0.0
        %1205 = vmatpush.msra.mxu0 0.0
        %1206 = vmatpush.msra.mxu0 0.0
        %1207 = vmatpush.msra.mxu0 0.0
        %1208 = vmatpush.msra.mxu0 0.0
        %1209 = vmatpush.msra.mxu0 0.0
        %1210 = vmatpush.msra.mxu0 0.0
        %1211 = vmatpush.msra.mxu0 0.0
        %1212 = vmatpush.msra.mxu0 0.0
        %1213 = vmatpush.msra.mxu0 0.0
        %1214 = vmatpush.msra.mxu0 0.0
        %1215 = vmatpush.msra.mxu0 %v837
        %1216 = vmatmul.f32.gmra.mxu0 %v1195
        %v1217 = vpop.f32.mrf.mxu0
        %v1218 = vadd.f32 0.0, %v1217
        %1219 = vmatmul.f32.gmra.mxu0 %v1198
        %v1220 = vpop.f32.mrf.mxu0
        %v1221 = vadd.f32 0.0, %v1220
        %1222 = vdwg.mxu0
        %v1223 = vadd.f32 %v1092, %v1218
        %v1224 = vadd.f32 %v1095, %v1221
        %1225 = vrot.lane.b32.xlu0 %v839, 104
        %v1226 = vpop.permute.xlu0 %1225
        %1227 = vrot.lane.b32.xlu0 %v840, 104
        %v1228 = vpop.permute.xlu0 %1227
        %1229 = vrot.lane.b32.xlu0 %v830, 72
        %v1230 = vpop.permute.xlu0 %1229
        %1231 = vrot.lane.b32.xlu0 %v833, 72
        %v1232 = vpop.permute.xlu0 %1231
        %v1233 = vsel %vm847, %v1226, 0
        %v1235 = vsel %vm847, %v1228, 0
        %v1237 = vsel %vm847, %v1230, 0
        %v1239 = vsel %vm847, %v1232, 0
        %1241 = vmatpush.xpose.msra.mxu0 0.0
        %1242 = vmatpush.xpose.msra.mxu0 0.0
        %1243 = vmatpush.xpose.msra.mxu0 0.0
        %1244 = vmatpush.xpose.msra.mxu0 0.0
        %1245 = vmatpush.xpose.msra.mxu0 0.0
        %1246 = vmatpush.xpose.msra.mxu0 0.0
        %1247 = vmatpush.xpose.msra.mxu0 0.0
        %1248 = vmatpush.xpose.msra.mxu0 0.0
        %1249 = vmatpush.xpose.msra.mxu0 0.0
        %1250 = vmatpush.xpose.msra.mxu0 0.0
        %1251 = vmatpush.xpose.msra.mxu0 0.0
        %1252 = vmatpush.xpose.msra.mxu0 0.0
        %1253 = vmatpush.xpose.msra.mxu0 0.0
        %1254 = vmatpush.xpose.msra.mxu0 0.0
        %1255 = vmatpush.xpose.msra.mxu0 %v1239
        %1256 = vmatpush.xpose.msra.mxu0 %v1237
        %1257 = vmatmul.f32.gmra.mxu0 %v1233
        %v1258 = vpop.f32.mrf.mxu0
        %v1259 = vadd.f32 0.0, %v1258
        %1260 = vmatmul.f32.gmra.mxu0 %v1235
        %v1261 = vpop.f32.mrf.mxu0
        %v1262 = vadd.f32 0.0, %v1261
        %1263 = vdwg.mxu0
        %v1264 = vsel %vm881, %v1259, -inf
        %1265 = vmax.xlane.f32.xlu0 %v1264
        %v1266 = vpop.xlane.xlu0 %1265
        %v1267 = vsel %vm885, %v1262, -inf
        %1268 = vmax.xlane.f32.xlu0 %v1267
        %v1269 = vpop.xlane.xlu0 %1268
        %v1270 = vsub.f32 %v1259, %v1266
        %v1271 = vsub.f32 %v1262, %v1269
        %v1272 = vmul.f32 %v1270, 1.442695
        %v1273 = vpow.pop %v1272
        %v1274 = vmul.f32 %v1271, 1.442695
        %v1275 = vpow.pop %v1274
        %v1276 = vsel %vm881, %v1273, 0.0
        %1277 = vadd.xlane.f32.xlu0 %v1276
        %v1278 = vpop.xlane.xlu0 %1277
        %v1279 = vsel %vm885, %v1275, 0.0
        %1280 = vadd.xlane.f32.xlu0 %v1279
        %v1281 = vpop.xlane.xlu0 %1280
        %v1282 = vrcp.pop %v1278
        %v1283 = vrcp.pop %v1281
        %v1284 = vmul.f32 %v1273, %v1282
        %v1285 = vmul.f32 %v1275, %v1283
        %1286 = vrot.lane.b32.xlu0 %v830, 40
        %v1287 = vpop.permute.xlu0 %1286
        %1288 = vrot.lane.b32.xlu0 %v833, 40
        %v1289 = vpop.permute.xlu0 %1288
        %v1292 = vsel %vm881, %v1284, 0
        %v1295 = vsel %vm881, %v1285, 0
        %v1297 = vsel %vm916, %v1289, 0
        %1299 = vmatpush.msra.mxu0 0.0
        %1300 = vmatpush.msra.mxu0 0.0
        %1301 = vmatpush.msra.mxu0 0.0
        %1302 = vmatpush.msra.mxu0 0.0
        %1303 = vmatpush.msra.mxu0 0.0
        %1304 = vmatpush.msra.mxu0 0.0
        %1305 = vmatpush.msra.mxu0 0.0
        %1306 = vmatpush.msra.mxu0 0.0
        %1307 = vmatpush.msra.mxu0 0.0
        %1308 = vmatpush.msra.mxu0 0.0
        %1309 = vmatpush.msra.mxu0 0.0
        %1310 = vmatpush.msra.mxu0 0.0
        %1311 = vmatpush.msra.mxu0 0.0
        %1312 = vmatpush.msra.mxu0 0.0
        %1313 = vmatpush.msra.mxu0 %v1297
        %1314 = vmatpush.msra.mxu0 %v1287
        %1315 = vmatmul.f32.gmra.mxu0 %v1292
        %v1316 = vpop.f32.mrf.mxu0
        %v1317 = vadd.f32 0.0, %v1316
        %1318 = vmatmul.f32.gmra.mxu0 %v1295
        %v1319 = vpop.f32.mrf.mxu0
        %v1320 = vadd.f32 0.0, %v1319
        %1321 = vdwg.mxu0
        %v1323 = vsel %vm847, %v1317, 0
        %v1326 = vsel %vm847, %v1320, 0
        %1328 = vmatpush.msra.mxu0 0.0
        %1329 = vmatpush.msra.mxu0 0.0
        %1330 = vmatpush.msra.mxu0 0.0
        %1331 = vmatpush.msra.mxu0 0.0
        %1332 = vmatpush.msra.mxu0 0.0
        %1333 = vmatpush.msra.mxu0 0.0
        %1334 = vmatpush.msra.mxu0 0.0
        %1335 = vmatpush.msra.mxu0 0.0
        %1336 = vmatpush.msra.mxu0 0.0
        %1337 = vmatpush.msra.mxu0 0.0
        %1338 = vmatpush.msra.mxu0 0.0
        %1339 = vmatpush.msra.mxu0 0.0
        %1340 = vmatpush.msra.mxu0 0.0
        %1341 = vmatpush.msra.mxu0 0.0
        %1342 = vmatpush.msra.mxu0 0.0
        %1343 = vmatpush.msra.mxu0 %v838
        %1344 = vmatmul.f32.gmra.mxu0 %v1323
        %v1345 = vpop.f32.mrf.mxu0
        %v1346 = vadd.f32 0.0, %v1345
        %1347 = vmatmul.f32.gmra.mxu0 %v1326
        %v1348 = vpop.f32.mrf.mxu0
        %v1349 = vadd.f32 0.0, %v1348
        %1350 = vdwg.mxu0
        %v1351 = vadd.f32 %v1223, %v1346
        %v1352 = vadd.f32 %v1224, %v1349
        %v1353 = vld [vmem:[%s634] sm:$0x1]
        %v1355 = vperm.slane %v1353, 0
        %v1357 = vadd.f32 %v1351, %v1355
        %v1358 = vadd.f32 %v1352, %v1355
        %v1359 = vadd.f32 %v1357, %v795
        %v1360 = vadd.f32 %v1358, %v796
        %v1361 = vld [vmem:[%s765] sm:$0x1]
        %v1362 = vld [vmem:[%s643] sm:$0x1]
        %v1363 = vsel %vm805, %v1359, 0.0
        %1364 = vadd.xlane.f32.xlu0 %v1363
        %v1365 = vpop.xlane.xlu0 %1364
        %vm1366 = vcmask 257024
        %v1367 = vsel %vm1366, %v1360, 0.0
        %1368 = vadd.xlane.f32.xlu0 %v1367
        %v1369 = vpop.xlane.xlu0 %1368
        %v1370 = vrcp.pop 32.0
        %v1371 = vmul.f32 32.0, %v1370
        %v1372 = vsub.f32 1.0, %v1371
        %v1373 = vmul.f32 %v1370, %v1372
        %v1374 = vadd.f32 %v1370, %v1373
        %vm1375 = vweird.f32 %v1370
        %v1376 = vsel %vm1375, %v1370, %v1374
        %v1377 = vmul.f32 %v1365, %v1376
        %v1378 = vmul.f32 %v1369, %v1376
        %v1379 = vsub.f32 %v1359, %v1377
        %v1380 = vsub.f32 %v1360, %v1378
        %v1381 = vmul.f32 %v1379, %v1379
        %v1382 = vmul.f32 %v1380, %v1380
        %v1383 = vsel %vm805, %v1381, 0.0
        %1384 = vadd.xlane.f32.xlu0 %v1383
        %v1385 = vpop.xlane.xlu0 %1384
        %v1386 = vsel %vm1366, %v1382, 0.0
        %1387 = vadd.xlane.f32.xlu0 %v1386
        %v1388 = vpop.xlane.xlu0 %1387
        %v1389 = vmul.f32 %v1385, %v1376
        %v1390 = vmul.f32 %v1388, %v1376
        %v1391 = vadd.f32 %v1389, 1e-12
        %v1392 = vadd.f32 %v1390, 1e-12
        %v1393 = vrsqrt.pop %v1391
        %v1394 = vmul.f32 %v1393, %v1391
        %v1395 = vmul.f32 %v1394, %v1393
        %v1396 = vmul.f32 0.5, %v1395
        %v1397 = vsub.f32 1.5, %v1396
        %v1398 = vmul.f32 %v1393, %v1397
        %vm1399 = vweird.f32 %v1391
        %vm1400 = vweird.f32 %v1393
        %vm1401 = vmor %vm1399, %vm1400
        %v1402 = vsel %vm1401, %v1393, %v1398
        %v1403 = vrsqrt.pop %v1392
        %v1404 = vmul.f32 %v1403, %v1392
        %v1405 = vmul.f32 %v1404, %v1403
        %v1406 = vmul.f32 0.5, %v1405
        %v1407 = vsub.f32 1.5, %v1406
        %v1408 = vmul.f32 %v1403, %v1407
        %vm1409 = vweird.f32 %v1392
        %vm1410 = vweird.f32 %v1403
        %vm1411 = vmor %vm1409, %vm1410
        %v1412 = vsel %vm1411, %v1403, %v1408
        %v1413 = vmul.f32 %v1379, %v1402
        %v1414 = vmul.f32 %v1380, %v1412
        %v1416 = vperm.slane %v1361, 0
        %v1418 = vmul.f32 %v1413, %v1416
        %v1419 = vmul.f32 %v1414, %v1416
        %v1421 = vperm.slane %v1362, 0
        %v1423 = vadd.f32 %v1418, %v1421
        %v1424 = vadd.f32 %v1419, %v1421
        %v1425 = vld [vmem:[%s770] sm:$0xff]
        %v1426 = vld [vmem:[%s770 + $0x8] sm:$0xff]
        %v1427 = vld [vmem:[%s770 + $0x10] sm:$0xff]
        %v1428 = vld [vmem:[%s770 + $0x18] sm:$0xff]
        %v1429 = vld [vmem:[%s773] sm:$0x1]
        %v1431 = vperm.slane %v1429, 0
        %v1434 = vsel %vm805, %v1423, 0
        %v1437 = vsel %vm805, %v1424, 0
        %1439 = vmatpush.msra.mxu0 0.0
        %1440 = vmatpush.msra.mxu0 0.0
        %1441 = vmatpush.msra.mxu0 0.0
        %1442 = vmatpush.msra.mxu0 0.0
        %1443 = vmatpush.msra.mxu0 0.0
        %1444 = vmatpush.msra.mxu0 0.0
        %1445 = vmatpush.msra.mxu0 0.0
        %1446 = vmatpush.msra.mxu0 0.0
        %1447 = vmatpush.msra.mxu0 0.0
        %1448 = vmatpush.msra.mxu0 0.0
        %1449 = vmatpush.msra.mxu0 0.0
        %1450 = vmatpush.msra.mxu0 0.0
        %1451 = vmatpush.msra.mxu0 %v1428
        %1452 = vmatpush.msra.mxu0 %v1427
        %1453 = vmatpush.msra.mxu0 %v1426
        %1454 = vmatpush.msra.mxu0 %v1425
        %1455 = vmatmul.f32.gmra.mxu0 %v1434
        %v1456 = vpop.f32.mrf.mxu0
        %v1457 = vadd.f32 %v1431, %v1456
        %1458 = vmatmul.f32.gmra.mxu0 %v1437
        %v1459 = vpop.f32.mrf.mxu0
        %v1460 = vadd.f32 %v1431, %v1459
        %1461 = vdwg.mxu0
        %v1462 = vmul.f32 %v1457, 0.5
        %v1463 = vmul.f32 %v1460, 0.5
        %v1464 = vmul.f32 %v1457, 0.044715
        %v1465 = vmul.f32 %v1460, 0.044715
        %v1466 = vmul.f32 %v1464, %v1457
        %v1467 = vmul.f32 %v1465, %v1460
        %v1468 = vmul.f32 %v1466, %v1457
        %v1469 = vmul.f32 %v1467, %v1460
        %v1470 = vadd.f32 %v1457, %v1468
        %v1471 = vadd.f32 %v1460, %v1469
        %v1472 = vmul.f32 %v1470, 0.7978846
        %v1473 = vmul.f32 %v1471, 0.7978846
        %v1474 = vtanh.pop %v1472
        %v1475 = vtanh.pop %v1473
        %v1476 = vadd.f32 %v1474, 1.0
        %v1477 = vadd.f32 %v1475, 1.0
        %v1478 = vmul.f32 %v1462, %v1476
        %v1479 = vmul.f32 %v1463, %v1477
        %v1480 = vld [vmem:[%s778] sm:$0xff]
        %v1481 = vld [vmem:[%s778 + $0x8] sm:$0xff]
        %v1482 = vld [vmem:[%s778 + $0x10] sm:$0xff]
        %v1483 = vld [vmem:[%s778 + $0x18] sm:$0xff]
        %v1484 = vld [vmem:[%s778 + $0x20] sm:$0xff]
        %v1485 = vld [vmem:[%s778 + $0x28] sm:$0xff]
        %v1486 = vld [vmem:[%s778 + $0x30] sm:$0xff]
        %v1487 = vld [vmem:[%s778 + $0x38] sm:$0xff]
        %v1488 = vld [vmem:[%s781] sm:$0x1]
        %v1490 = vperm.slane %v1488, 0
        %vm1492 = vcmask 523264
        %v1494 = vsel %vm1492, %v1478, 0
        %v1497 = vsel %vm1492, %v1479, 0
        %1499 = vmatpush.msra.mxu0 0.0
        %1500 = vmatpush.msra.mxu0 0.0
        %1501 = vmatpush.msra.mxu0 0.0
        %1502 = vmatpush.msra.mxu0 0.0
        %1503 = vmatpush.msra.mxu0 0.0
        %1504 = vmatpush.msra.mxu0 0.0
        %1505 = vmatpush.msra.mxu0 0.0
        %1506 = vmatpush.msra.mxu0 0.0
        %1507 = vmatpush.msra.mxu0 %v1487
        %1508 = vmatpush.msra.mxu0 %v1486
        %1509 = vmatpush.msra.mxu0 %v1485
        %1510 = vmatpush.msra.mxu0 %v1484
        %1511 = vmatpush.msra.mxu0 %v1483
        %1512 = vmatpush.msra.mxu0 %v1482
        %1513 = vmatpush.msra.mxu0 %v1481
        %1514 = vmatpush.msra.mxu0 %v1480
        %1515 = vmatmul.f32.gmra.mxu0 %v1494
        %v1516 = vpop.f32.mrf.mxu0
        %v1517 = vadd.f32 %v1490, %v1516
        %1518 = vmatmul.f32.gmra.mxu0 %v1497
        %v1519 = vpop.f32.mrf.mxu0
        %v1520 = vadd.f32 %v1490, %v1519
        %1521 = vdwg.mxu0
        %v1522 = vadd.f32 %v1517, %v1423
        %v1523 = vadd.f32 %v1520, %v1424
        %v1524 = vld [vmem:[%s784] sm:$0x1]
        %v1525 = vld [vmem:[%s652] sm:$0x1]
        %v1526 = vsel %vm805, %v1522, 0.0
        %1527 = vadd.xlane.f32.xlu0 %v1526
        %v1528 = vpop.xlane.xlu0 %1527
        %v1529 = vsel %vm1366, %v1523, 0.0
        %1530 = vadd.xlane.f32.xlu0 %v1529
        %v1531 = vpop.xlane.xlu0 %1530
        %v1532 = vmul.f32 %v1528, %v1376
        %v1533 = vmul.f32 %v1531, %v1376
        %v1534 = vsub.f32 %v1522, %v1532
        %v1535 = vsub.f32 %v1523, %v1533
        %v1536 = vmul.f32 %v1534, %v1534
        %v1537 = vmul.f32 %v1535, %v1535
        %v1538 = vsel %vm805, %v1536, 0.0
        %1539 = vadd.xlane.f32.xlu0 %v1538
        %v1540 = vpop.xlane.xlu0 %1539
        %v1541 = vsel %vm1366, %v1537, 0.0
        %1542 = vadd.xlane.f32.xlu0 %v1541
        %v1543 = vpop.xlane.xlu0 %1542
        %v1544 = vmul.f32 %v1540, %v1376
        %v1545 = vmul.f32 %v1543, %v1376
        %v1546 = vadd.f32 %v1544, 1e-12
        %v1547 = vadd.f32 %v1545, 1e-12
        %v1548 = vrsqrt.pop %v1546
        %v1549 = vmul.f32 %v1548, %v1546
        %v1550 = vmul.f32 %v1549, %v1548
        %v1551 = vmul.f32 0.5, %v1550
        %v1552 = vsub.f32 1.5, %v1551
        %v1553 = vmul.f32 %v1548, %v1552
        %vm1554 = vweird.f32 %v1546
        %vm1555 = vweird.f32 %v1548
        %vm1556 = vmor %vm1554, %vm1555
        %v1557 = vsel %vm1556, %v1548, %v1553
        %v1558 = vrsqrt.pop %v1547
        %v1559 = vmul.f32 %v1558, %v1547
        %v1560 = vmul.f32 %v1559, %v1558
        %v1561 = vmul.f32 0.5, %v1560
        %v1562 = vsub.f32 1.5, %v1561
        %v1563 = vmul.f32 %v1558, %v1562
        %vm1564 = vweird.f32 %v1547
        %vm1565 = vweird.f32 %v1558
        %vm1566 = vmor %vm1564, %vm1565
        %v1567 = vsel %vm1566, %v1558, %v1563
        %v1568 = vmul.f32 %v1534, %v1557
        %v1569 = vmul.f32 %v1535, %v1567
        %v1571 = vperm.slane %v1524, 0
        %v1573 = vmul.f32 %v1568, %v1571
        %v1574 = vmul.f32 %v1569, %v1571
        %v1576 = vperm.slane %v1525, 0
        %v1578 = vadd.f32 %v1573, %v1576
        %v1579 = vadd.f32 %v1574, %v1576
        %1580 = vst.msk [vmem:[#allocation2] sm:$0xff] %vm805, %v1578
        %1581 = vst.msk [vmem:[#allocation2 + $0x8] sm:$0xf] %vm1366, %v1579
        %p1582 = scmp.eq.s32.totalorder %s42, 1
        // Predicated region
        $region101: #{tpu_custom_call.1} parent=75 // pred_check
          %p1583 = pneg %p1582
        $region102: #{tpu_custom_call.1} parent=75 // pred_check_branch
          %1585 = sbr.rel (%p1583) target = $region104
        $region103: #{tpu_custom_call.1} parent=75 // pred_region
          %1586 = vst.msk [vmem:[%s749] sm:$0xff] %vm805, %v1578
        $region104: #{tpu_custom_call.1} parent=75 // pred_fallthru
          _
        %s1587 = sand.u32 %s421, 1
        %s1588 = scalar_lea.sflag [#allocation5], %s1587
        %s1589 = sand.u32 %s421, 1
        %s1590 = smul.addr %s1589, 8
        %s1591 = scalar_lea.vmem [#allocation12], %s1590
        // Predicated region
        $region105: #{tpu_custom_call.1} parent=75 // pred_check
          %p1592 = pneg %p431
        $region106: #{tpu_custom_call.1} parent=75 // pred_check_branch
          %1594 = sbr.rel (%p1592) target = $region108
        $region107: #{tpu_custom_call.1} parent=75 // pred_region
          %1596 = vsyncadd %s1588, 0
          %s1597 = smul.addr %s41, 8
          %s1598 = scalar_lea.hbm %s14, %s1597
          %s1600 = sshll.u32 %s1591, 4
          %s1601 = int_to_ptr.vmem [resolvable:$true] %s1600
          %s1602 = sshll.u32 %s1598, 4
          %s1603 = int_to_ptr.hbm [resolvable:$true] %s1602
          %1605 = dma.vmem_to_hbm [thread:$0]  %s1601, 128, %s1603, %s1588
        $region108: #{tpu_custom_call.1} parent=75 // pred_fallthru
          _
      $region76: #{tpu_custom_call.1} parent=5 // pred_fallthru
        _
      %p1606 = scmp.le.s32.totalorder 2, %s32
      // Predicated region
      $region109: #{tpu_custom_call.1} parent=5 // pred_check
        %p1607 = pneg %p1606
      $region110: #{tpu_custom_call.1} parent=5 // pred_check_branch
        %1609 = sbr.rel (%p1607) target = $region112
      $region111: #{tpu_custom_call.1} parent=5 // pred_region
        %s1610 = ssub.s32 %s32, 2
        // Predicated region
        $region113: #{tpu_custom_call.1} parent=111 // pred_check
          %p1611 = pneg %p437
        $region114: #{tpu_custom_call.1} parent=111 // pred_check_branch
          %1613 = sbr.rel (%p1611) target = $region116
        $region115: #{tpu_custom_call.1} parent=111 // pred_region
          %s1614 = sand.u32 %s422, 1
          %s1615 = scalar_lea.sflag [#allocation5], %s1614
          %s1616 = sand.u32 %s422, 1
          %s1617 = smul.addr %s1616, 8
          %s1618 = scalar_lea.vmem [#allocation12], %s1617
          %1620 = dma.done %s1615, 128
        $region116: #{tpu_custom_call.1} parent=111 // pred_fallthru
          _
      $region112: #{tpu_custom_call.1} parent=5 // pred_fallthru
        _
    $region6: #{tpu_custom_call.1} parent=1 // loop_footer
      %s36 = sadd.s32 1, %s32
    $region7: #{tpu_custom_call.1} parent=1 // loop_footer_branch
      %31 = sbr.rel target = $region3
    $region8: #{tpu_custom_call.1} parent=1 // loop_exit
      _
    %1621 = vsyncpa [#allocation4], 1
    %s1622 = scalar_lea.sflag [#allocation4], 1
    %1623 = vsyncpa %s1622, 1
    %1624 = vsyncpa [#allocation7], 1
    %s1625 = scalar_lea.sflag [#allocation7], 1
    %1626 = vsyncpa %s1625, 1
    %1627 = vsyncpa [#allocation10], 1
    %s1628 = scalar_lea.sflag [#allocation10], 1
    %1629 = vsyncpa %s1628, 1
    %1630 = vsyncpa [#allocation5], 1
    %s1631 = scalar_lea.sflag [#allocation5], 1
    %1632 = vsyncpa %s1631, 1

</llo_original>
